<compile_context>
chip_gen: v6e
topology: v6e:2x2x1
jax: 0.10.0
libtpu: 0.0.40
codegen_flags: <defaults>
</compile_context>

<pallas_src>
import jax
import jax.numpy as jnp
from jax.experimental import pallas as pl
from jax.experimental.pallas import tpu as pltpu


def _round_up(n, m):
    return ((n + m - 1) // m) * m


# ---------------------------------------------------------------------------
# Fused kernel: encoder MLP -> softmax alpha -> z = alpha @ D.T -> decoder MLP
# One grid step processes a [TB, ...] batch tile; all weights stay resident.
# ---------------------------------------------------------------------------
def cvae_dict_kernel(
    x_ref,       # [TB, IN]         input dtype (f32 or bf16), batch-tiled
    cs_ref,      # [TB, COND]       c_src, batch-tiled
    ct_ref,      # [TB, COND]       c_tgt, batch-tiled
    ew1x_ref,    # [IN, H1]         bf16, resident
    ew1c_ref,    # [COND, H1]       bf16, resident
    eb1_ref,     # [1, H1]          f32
    ew2_ref,     # [H1, CODE_PAD]   bf16
    eb2_ref,     # [1, CODE_PAD]    f32 (-1e30 in pad columns)
    dict_t_ref,  # [CODE_PAD, DICT] bf16 (dictionary pre-transposed, pad rows 0)
    dw1z_ref,    # [DICT, H1]       bf16
    dw1c_ref,    # [COND, H1]       bf16
    db1_ref,     # [1, H1]          f32
    dw2_ref,     # [H1, IN]         bf16
    db2_ref,     # [1, IN]          f32
    xhat_ref,    # out [TB, IN]        bf16
    alpha_ref,   # out [TB, CODE_DIM]  bf16
):
    x = x_ref[...].astype(jnp.bfloat16)
    cs = cs_ref[...].astype(jnp.bfloat16)
    ct = ct_ref[...].astype(jnp.bfloat16)

    # ---- Encoder: alpha = softmax(W2 relu(x W1x + c_src W1c + b1) + b2) ----
    h1 = (
        jnp.dot(x, ew1x_ref[...], preferred_element_type=jnp.float32)
        + jnp.dot(cs, ew1c_ref[...], preferred_element_type=jnp.float32)
        + eb1_ref[...]
    )
    h1 = jnp.maximum(h1, 0.0)
    logits = (
        jnp.dot(h1.astype(jnp.bfloat16), ew2_ref[...],
                preferred_element_type=jnp.float32)
        + eb2_ref[...]
    )
    # Exact, numerically stable softmax in f32; pad columns carry -1e30 so
    # their exp is exactly 0 and the normalization over code_dim is exact.
    m = jnp.max(logits, axis=-1, keepdims=True)
    e = jnp.exp(logits - m)
    alpha = e / jnp.sum(e, axis=-1, keepdims=True)
    alpha_ref[...] = alpha[:, : alpha_ref.shape[-1]].astype(alpha_ref.dtype)

    # ---- Dictionary: z = alpha @ D.T (pre-transposed; pad rows are zero) ----
    z = jnp.dot(alpha.astype(jnp.bfloat16), dict_t_ref[...],
                preferred_element_type=jnp.float32)

    # ---- Decoder: x_hat = sigmoid(W2 relu(z W1z + c_tgt W1c + b1) + b2) ----
    g1 = (
        jnp.dot(z.astype(jnp.bfloat16), dw1z_ref[...],
                preferred_element_type=jnp.float32)
        + jnp.dot(ct, dw1c_ref[...], preferred_element_type=jnp.float32)
        + db1_ref[...]
    )
    g1 = jnp.maximum(g1, 0.0)
    out = (
        jnp.dot(g1.astype(jnp.bfloat16), dw2_ref[...],
                preferred_element_type=jnp.float32)
        + db2_ref[...]
    )
    xhat_ref[...] = jax.nn.sigmoid(out).astype(xhat_ref.dtype)


def cvae_dict_forward(x_nchw, c_src, c_tgt, params, *, tb=None,
                      out_dtype=jnp.bfloat16):
    """cVAE_Dict forward.  x_nchw: [B, 1, H, W]; c_src/c_tgt: [B, cond_dim].

    Outputs are bfloat16 by default (kernel is HBM-bound); pass
    out_dtype=jnp.float32 if a consumer truly needs f32.
    """
    B = x_nchw.shape[0]
    in_dim = x_nchw.shape[1] * x_nchw.shape[2] * x_nchw.shape[3]
    cond_dim = c_src.shape[1]
    hidden = params["enc_w1_x"].shape[1]
    code_dim = params["enc_w2"].shape[1]
    dict_dim = params["dictionary"].shape[0]
    code_pad = _round_up(max(code_dim, 128), 128)   # lane-dense softmax slab

    # Contiguous NCHW -> [B, in_dim] is layout-preserving (torch x.view(B,-1)).
    x_flat = x_nchw.reshape(B, in_dim)

    x_bytes = jnp.dtype(x_flat.dtype).itemsize
    c_bytes = jnp.dtype(c_src.dtype).itemsize
    out_bytes = jnp.dtype(out_dtype).itemsize

    # --- resident weights: bf16 MXU operands, f32 biases ---
    ew1x = params["enc_w1_x"].astype(jnp.bfloat16)
    ew1c = params["enc_w1_c"].astype(jnp.bfloat16)
    eb1 = params["enc_b1"].reshape(1, hidden).astype(jnp.float32)
    ew2 = jnp.pad(params["enc_w2"],
                  ((0, 0), (0, code_pad - code_dim))).astype(jnp.bfloat16)
    eb2 = jnp.pad(params["enc_b2"].reshape(1, code_dim),
                  ((0, 0), (0, code_pad - code_dim)),
                  constant_values=-1e30).astype(jnp.float32)
    dict_t = jnp.pad(params["dictionary"].T,
                     ((0, code_pad - code_dim), (0, 0))).astype(jnp.bfloat16)
    dw1z = params["dec_w1_z"].astype(jnp.bfloat16)
    dw1c = params["dec_w1_c"].astype(jnp.bfloat16)
    db1 = params["dec_b1"].reshape(1, hidden).astype(jnp.float32)
    dw2 = params["dec_w2"].astype(jnp.bfloat16)
    db2 = params["dec_b2"].reshape(1, in_dim).astype(jnp.float32)
    residents = (ew1x, ew1c, eb1, ew2, eb2, dict_t, dw1z, dw1c, db1, dw2, db2)
    resident_bytes = sum(int(a.size) * jnp.dtype(a.dtype).itemsize
                         for a in residents)

    # --- batch tile: big (mem-bound), multiple of 8, >= 2 grid steps when
    #     possible (v7x megacore), VMEM-budgeted (v7x has 64 MiB physical) ---
    if tb is None:
        tb = 512
    tb = max(8, _round_up(min(tb, _round_up(B, 8)), 8))
    while _round_up(B, tb) // tb < 2 and tb >= 16:
        tb = _round_up(tb // 2, 8)

    def vmem_estimate(t):
        tiled_in = t * (in_dim * x_bytes + 2 * cond_dim * c_bytes)
        tiled_out = t * (in_dim + code_dim) * out_bytes
        scratch = t * (2 * hidden + code_pad + dict_dim + in_dim) * 4
        # worst case: everything (incl. residents) double-buffered
        return 2 * (tiled_in + tiled_out + resident_bytes) + scratch

    VMEM_BUDGET = 24 * 2 ** 20
    while vmem_estimate(tb) > VMEM_BUDGET and tb > 8:
        tb = max(8, _round_up(tb // 2, 8))
    b_pad = _round_up(B, tb)
    grid = (b_pad // tb,)
    vmem_limit = int(min(56 * 2 ** 20,
                         max(32 * 2 ** 20, 2 * vmem_estimate(tb))))

    def pad_batch(a):
        return a if b_pad == B else jnp.pad(a, ((0, b_pad - B), (0, 0)))

    # Activations are streamed at their incoming dtype (cast to bf16 inside the
    # kernel), so the wrapper adds no cast/concat HBM pass; callers that hold
    # activations in bf16 automatically stream half the bytes.
    x_in = pad_batch(x_flat)
    cs_in = pad_batch(c_src)
    ct_in = pad_batch(c_tgt)

    flops = int(2 * b_pad * (in_dim * hidden + cond_dim * hidden
                             + hidden * code_pad + code_pad * dict_dim
                             + dict_dim * hidden + cond_dim * hidden
                             + hidden * in_dim))
    transcendentals = int(b_pad * (code_pad + in_dim))
    bytes_accessed = int(
        x_in.size * x_bytes + (cs_in.size + ct_in.size) * c_bytes
        + resident_bytes + b_pad * (in_dim + code_dim) * out_bytes)

    def tiled(width):
        return pl.BlockSpec((tb, width), lambda i: (i, 0))

    def run(resident_mode):
        def resident(arr):
            zeros = (0,) * arr.ndim
            if resident_mode is None:
                return pl.BlockSpec(arr.shape, lambda i: zeros)
            return pl.BlockSpec(arr.shape, lambda i: zeros,
                                pipeline_mode=resident_mode)

        in_specs = [
            tiled(in_dim), tiled(cond_dim), tiled(cond_dim),
            resident(ew1x), resident(ew1c), resident(eb1),
            resident(ew2), resident(eb2), resident(dict_t),
            resident(dw1z), resident(dw1c), resident(db1),
            resident(dw2), resident(db2),
        ]
        out_specs = (tiled(in_dim), tiled(code_dim))
        out_shape = (
            jax.ShapeDtypeStruct((b_pad, in_dim), out_dtype),
            jax.ShapeDtypeStruct((b_pad, code_dim), out_dtype),
        )
        return pl.pallas_call(
            cvae_dict_kernel,
            out_shape=out_shape,
            grid=grid,
            in_specs=in_specs,
            out_specs=out_specs,
            compiler_params=pltpu.CompilerParams(
                dimension_semantics=("parallel",),
                vmem_limit_bytes=vmem_limit),
            cost_estimate=pl.CostEstimate(
                flops=flops, transcendentals=transcendentals,
                bytes_accessed=bytes_accessed),
        )(x_in, cs_in, ct_in, ew1x, ew1c, eb1, ew2, eb2, dict_t,
          dw1z, dw1c, db1, dw2, db2)

    try:
        # Resident weights: single-buffered (their block index never changes).
        x_hat_pad, alpha_pad = run(pl.Buffered(1))
    except Exception:  # fall back to default double buffering if unsupported
        x_hat_pad, alpha_pad = run(None)

    x_hat = x_hat_pad[:B].reshape(x_nchw.shape)
    alpha = alpha_pad[:B]
    return x_hat, alpha


def cvae_dict_reference(x_nchw, c_src, c_tgt, params):
    """Pure-JAX f32 reference of the same forward pass (sanity check)."""
    B = x_nchw.shape[0]
    x = x_nchw.reshape(B, -1).astype(jnp.float32)
    h1 = jnp.maximum(
        x @ params["enc_w1_x"] + c_src @ params["enc_w1_c"] + params["enc_b1"], 0.0)
    logits = h1 @ params["enc_w2"] + params["enc_b2"]
    alpha = jax.nn.softmax(logits, axis=-1)
    z = alpha @ params["dictionary"].T
    g1 = jnp.maximum(
        z @ params["dec_w1_z"] + c_tgt @ params["dec_w1_c"] + params["dec_b1"], 0.0)
    x_hat = jax.nn.sigmoid(g1 @ params["dec_w2"] + params["dec_b2"])
    return x_hat.reshape(x_nchw.shape), alpha


def init_params(key, in_dim, cond_dim, code_dim, dict_dim, hidden):
    ks = jax.random.split(key, 8)
    s = 0.02
    return {
        # Encoder
        "enc_w1_x": s * jax.random.normal(ks[0], (in_dim, hidden), jnp.float32),
        "enc_w1_c": s * jax.random.normal(ks[1], (cond_dim, hidden), jnp.float32),
        "enc_b1": jnp.zeros((1, hidden), jnp.float32),
        "enc_w2": s * jax.random.normal(ks[2], (hidden, code_dim), jnp.float32),
        "enc_b2": jnp.zeros((1, code_dim), jnp.float32),
        # Dictionary (torch.randn(dict_dim, code_dim))
        "dictionary": jax.random.normal(ks[3], (dict_dim, code_dim), jnp.float32),
        # Decoder
        "dec_w1_z": s * jax.random.normal(ks[4], (dict_dim, hidden), jnp.float32),
        "dec_w1_c": s * jax.random.normal(ks[5], (cond_dim, hidden), jnp.float32),
        "dec_b1": jnp.zeros((1, hidden), jnp.float32),
        "dec_w2": s * jax.random.normal(ks[6], (hidden, in_dim), jnp.float32),
        "dec_b2": jnp.zeros((1, in_dim), jnp.float32),
    }


if __name__ == "__main__":
    # small shapes consistent with the module
    B, C, H, W = 2, 1, 16, 16
    cond_dim, code_dim, dict_dim, hidden = 8, 32, 64, 128
    in_dim = C * H * W

    key = jax.random.PRNGKey(0)
    k_x, k_cs, k_ct, k_p = jax.random.split(key, 4)

    x = jax.random.normal(k_x, (B, C, H, W), jnp.float32)
    c_src = jax.random.normal(k_cs, (B, cond_dim), jnp.float32)
    c_tgt = jax.random.normal(k_ct, (B, cond_dim), jnp.float32)
    params = init_params(k_p, in_dim, cond_dim, code_dim, dict_dim, hidden)

    x_hat, alpha = cvae_dict_forward(x, c_src, c_tgt, params)
    jax.block_until_ready((x_hat, alpha))

    assert x_hat.shape == (B, C, H, W)
    assert alpha.shape == (B, code_dim)

    x_hat_f32 = x_hat.astype(jnp.float32)
    alpha_f32 = alpha.astype(jnp.float32)
    assert bool(jnp.all(jnp.isfinite(x_hat_f32)))
    assert bool(jnp.all(jnp.isfinite(alpha_f32)))

    # loose tolerance: kernel uses bf16 MXU operands / bf16 outputs, ref is f32
    x_ref, a_ref = cvae_dict_reference(x, c_src, c_tgt, params)
    assert float(jnp.max(jnp.abs(x_hat_f32 - x_ref))) < 1e-1
    assert float(jnp.max(jnp.abs(alpha_f32 - a_ref))) < 1e-1

    print("KERNEL_OK")
</pallas_src>

<mosaic_0001>
module attributes {stable_mosaic.version = 11 : i64} {
  func.func @cvae_dict_kernel(%arg0: i32, %arg1: memref<8x256xf32, #tpu.memory_space<vmem>>, %arg2: memref<8x8xf32, #tpu.memory_space<vmem>>, %arg3: memref<8x8xf32, #tpu.memory_space<vmem>>, %arg4: memref<256x128xbf16, #tpu.memory_space<vmem>>, %arg5: memref<8x128xbf16, #tpu.memory_space<vmem>>, %arg6: memref<1x128xf32, #tpu.memory_space<vmem>>, %arg7: memref<128x128xbf16, #tpu.memory_space<vmem>>, %arg8: memref<1x128xf32, #tpu.memory_space<vmem>>, %arg9: memref<128x64xbf16, #tpu.memory_space<vmem>>, %arg10: memref<64x128xbf16, #tpu.memory_space<vmem>>, %arg11: memref<8x128xbf16, #tpu.memory_space<vmem>>, %arg12: memref<1x128xf32, #tpu.memory_space<vmem>>, %arg13: memref<128x256xbf16, #tpu.memory_space<vmem>>, %arg14: memref<1x256xf32, #tpu.memory_space<vmem>>, %arg15: memref<8x256xbf16, #tpu.memory_space<vmem>>, %arg16: memref<8x32xbf16, #tpu.memory_space<vmem>>) attributes {dimension_semantics = [#tpu.dimension_semantics<parallel>], iteration_bounds = array<i64: 1>, scalar_prefetch = 0 : i64, scratch_operands = 0 : i64, tpu.core_type = #tpu.core_type<tc>, window_params = [{transform_indices = @transform_0, window_bounds = array<i64: 8, 256>}, {transform_indices = @transform_1, window_bounds = array<i64: 8, 8>}, {transform_indices = @transform_2, window_bounds = array<i64: 8, 8>}, {pipeline_mode = #tpu.pipeline_mode<synchronous>, transform_indices = @transform_3, window_bounds = array<i64: 256, 128>}, {pipeline_mode = #tpu.pipeline_mode<synchronous>, transform_indices = @transform_4, window_bounds = array<i64: 8, 128>}, {pipeline_mode = #tpu.pipeline_mode<synchronous>, transform_indices = @transform_5, window_bounds = array<i64: 1, 128>}, {pipeline_mode = #tpu.pipeline_mode<synchronous>, transform_indices = @transform_6, window_bounds = array<i64: 128, 128>}, {pipeline_mode = #tpu.pipeline_mode<synchronous>, transform_indices = @transform_7, window_bounds = array<i64: 1, 128>}, {pipeline_mode = #tpu.pipeline_mode<synchronous>, transform_indices = @transform_8, window_bounds = array<i64: 128, 64>}, {pipeline_mode = #tpu.pipeline_mode<synchronous>, transform_indices = @transform_9, window_bounds = array<i64: 64, 128>}, {pipeline_mode = #tpu.pipeline_mode<synchronous>, transform_indices = @transform_10, window_bounds = array<i64: 8, 128>}, {pipeline_mode = #tpu.pipeline_mode<synchronous>, transform_indices = @transform_11, window_bounds = array<i64: 1, 128>}, {pipeline_mode = #tpu.pipeline_mode<synchronous>, transform_indices = @transform_12, window_bounds = array<i64: 128, 256>}, {pipeline_mode = #tpu.pipeline_mode<synchronous>, transform_indices = @transform_13, window_bounds = array<i64: 1, 256>}, {transform_indices = @transform_14, window_bounds = array<i64: 8, 256>}, {transform_indices = @transform_15, window_bounds = array<i64: 8, 32>}]} {
    %c0 = arith.constant 0 : index
    %c0_0 = arith.constant 0 : index
    %0 = vector.load %arg1[%c0, %c0_0] : memref<8x256xf32, #tpu.memory_space<vmem>>, vector<8x256xf32>
    %1 = arith.truncf %0 : vector<8x256xf32> to vector<8x256xbf16>
    %c0_1 = arith.constant 0 : index
    %c0_2 = arith.constant 0 : index
    %2 = vector.load %arg2[%c0_1, %c0_2] : memref<8x8xf32, #tpu.memory_space<vmem>>, vector<8x8xf32>
    %3 = arith.truncf %2 : vector<8x8xf32> to vector<8x8xbf16>
    %c0_3 = arith.constant 0 : index
    %c0_4 = arith.constant 0 : index
    %4 = vector.load %arg3[%c0_3, %c0_4] : memref<8x8xf32, #tpu.memory_space<vmem>>, vector<8x8xf32>
    %5 = arith.truncf %4 : vector<8x8xf32> to vector<8x8xbf16>
    %c0_5 = arith.constant 0 : index
    %c0_6 = arith.constant 0 : index
    %6 = vector.load %arg4[%c0_5, %c0_6] : memref<256x128xbf16, #tpu.memory_space<vmem>>, vector<256x128xbf16>
    %cst = arith.constant dense<0.000000e+00> : vector<8x128xf32>
    %7 = tpu.matmul %1, %6, %cst {dimension_numbers = #tpu.dot_dimension_numbers<[1], [0], [0], [1], [0, 0, 1, 1], [], []>} : vector<8x256xbf16>, vector<256x128xbf16>, vector<8x128xf32> -> vector<8x128xf32>
    %c0_7 = arith.constant 0 : index
    %c0_8 = arith.constant 0 : index
    %8 = vector.load %arg5[%c0_7, %c0_8] : memref<8x128xbf16, #tpu.memory_space<vmem>>, vector<8x128xbf16>
    %cst_9 = arith.constant dense<0.000000e+00> : vector<8x128xf32>
    %9 = tpu.matmul %3, %8, %cst_9 {dimension_numbers = #tpu.dot_dimension_numbers<[1], [0], [0], [1], [0, 0, 1, 1], [], []>} : vector<8x8xbf16>, vector<8x128xbf16>, vector<8x128xf32> -> vector<8x128xf32>
    %10 = arith.addf %7, %9 : vector<8x128xf32>
    %c0_10 = arith.constant 0 : index
    %c0_11 = arith.constant 0 : index
    %11 = vector.load %arg6[%c0_10, %c0_11] : memref<1x128xf32, #tpu.memory_space<vmem>>, vector<1x128xf32>
    %12 = vector.broadcast %11 : vector<1x128xf32> to vector<8x128xf32>
    %13 = arith.addf %10, %12 : vector<8x128xf32>
    %cst_12 = arith.constant 0.000000e+00 : f32
    %14 = vector.broadcast %cst_12 : f32 to vector<8x128xf32>
    %15 = arith.maximumf %13, %14 : vector<8x128xf32>
    %16 = arith.truncf %15 : vector<8x128xf32> to vector<8x128xbf16>
    %c0_13 = arith.constant 0 : index
    %c0_14 = arith.constant 0 : index
    %17 = vector.load %arg7[%c0_13, %c0_14] : memref<128x128xbf16, #tpu.memory_space<vmem>>, vector<128x128xbf16>
    %cst_15 = arith.constant dense<0.000000e+00> : vector<8x128xf32>
    %18 = tpu.matmul %16, %17, %cst_15 {dimension_numbers = #tpu.dot_dimension_numbers<[1], [0], [0], [1], [0, 0, 1, 1], [], []>} : vector<8x128xbf16>, vector<128x128xbf16>, vector<8x128xf32> -> vector<8x128xf32>
    %c0_16 = arith.constant 0 : index
    %c0_17 = arith.constant 0 : index
    %19 = vector.load %arg8[%c0_16, %c0_17] : memref<1x128xf32, #tpu.memory_space<vmem>>, vector<1x128xf32>
    %20 = vector.broadcast %19 : vector<1x128xf32> to vector<8x128xf32>
    %21 = arith.addf %18, %20 : vector<8x128xf32>
    %cst_18 = arith.constant dense<0xFF800000> : vector<8xf32>
    %22 = vector.multi_reduction <maximumf>, %21, %cst_18 [1] : vector<8x128xf32> to vector<8xf32>
    %23 = vector.shape_cast %22 : vector<8xf32> to vector<8x1xf32>
    %24 = vector.broadcast %23 : vector<8x1xf32> to vector<8x128xf32>
    %25 = arith.subf %21, %24 : vector<8x128xf32>
    %26 = math.exp %25 : vector<8x128xf32>
    %cst_19 = arith.constant dense<0.000000e+00> : vector<8xf32>
    %27 = vector.multi_reduction <add>, %26, %cst_19 [1] : vector<8x128xf32> to vector<8xf32>
    %28 = vector.shape_cast %27 : vector<8xf32> to vector<8x1xf32>
    %29 = vector.broadcast %28 : vector<8x1xf32> to vector<8x128xf32>
    %30 = arith.divf %26, %29 : vector<8x128xf32>
    %31 = vector.extract_strided_slice %30 {offsets = [0, 0], sizes = [8, 32], strides = [1, 1]} : vector<8x128xf32> to vector<8x32xf32>
    %32 = arith.truncf %31 : vector<8x32xf32> to vector<8x32xbf16>
    %c0_20 = arith.constant 0 : index
    %c0_21 = arith.constant 0 : index
    %33 = vector.load %arg16[%c0_20, %c0_21] : memref<8x32xbf16, #tpu.memory_space<vmem>>, vector<8x32xbf16>
    tpu.vector_store %arg16[%c0_20, %c0_21], %32 {strides = array<i32>} : memref<8x32xbf16, #tpu.memory_space<vmem>>, vector<8x32xbf16>,
    %34 = arith.truncf %30 : vector<8x128xf32> to vector<8x128xbf16>
    %c0_22 = arith.constant 0 : index
    %c0_23 = arith.constant 0 : index
    %35 = vector.load %arg9[%c0_22, %c0_23] : memref<128x64xbf16, #tpu.memory_space<vmem>>, vector<128x64xbf16>
    %cst_24 = arith.constant dense<0.000000e+00> : vector<8x64xf32>
    %36 = tpu.matmul %34, %35, %cst_24 {dimension_numbers = #tpu.dot_dimension_numbers<[1], [0], [0], [1], [0, 0, 1, 1], [], []>} : vector<8x128xbf16>, vector<128x64xbf16>, vector<8x64xf32> -> vector<8x64xf32>
    %37 = arith.truncf %36 : vector<8x64xf32> to vector<8x64xbf16>
    %c0_25 = arith.constant 0 : index
    %c0_26 = arith.constant 0 : index
    %38 = vector.load %arg10[%c0_25, %c0_26] : memref<64x128xbf16, #tpu.memory_space<vmem>>, vector<64x128xbf16>
    %cst_27 = arith.constant dense<0.000000e+00> : vector<8x128xf32>
    %39 = tpu.matmul %37, %38, %cst_27 {dimension_numbers = #tpu.dot_dimension_numbers<[1], [0], [0], [1], [0, 0, 1, 1], [], []>} : vector<8x64xbf16>, vector<64x128xbf16>, vector<8x128xf32> -> vector<8x128xf32>
    %c0_28 = arith.constant 0 : index
    %c0_29 = arith.constant 0 : index
    %40 = vector.load %arg11[%c0_28, %c0_29] : memref<8x128xbf16, #tpu.memory_space<vmem>>, vector<8x128xbf16>
    %cst_30 = arith.constant dense<0.000000e+00> : vector<8x128xf32>
    %41 = tpu.matmul %5, %40, %cst_30 {dimension_numbers = #tpu.dot_dimension_numbers<[1], [0], [0], [1], [0, 0, 1, 1], [], []>} : vector<8x8xbf16>, vector<8x128xbf16>, vector<8x128xf32> -> vector<8x128xf32>
    %42 = arith.addf %39, %41 : vector<8x128xf32>
    %c0_31 = arith.constant 0 : index
    %c0_32 = arith.constant 0 : index
    %43 = vector.load %arg12[%c0_31, %c0_32] : memref<1x128xf32, #tpu.memory_space<vmem>>, vector<1x128xf32>
    %44 = vector.broadcast %43 : vector<1x128xf32> to vector<8x128xf32>
    %45 = arith.addf %42, %44 : vector<8x128xf32>
    %cst_33 = arith.constant 0.000000e+00 : f32
    %46 = vector.broadcast %cst_33 : f32 to vector<8x128xf32>
    %47 = arith.maximumf %45, %46 : vector<8x128xf32>
    %48 = arith.truncf %47 : vector<8x128xf32> to vector<8x128xbf16>
    %c0_34 = arith.constant 0 : index
    %c0_35 = arith.constant 0 : index
    %49 = vector.load %arg13[%c0_34, %c0_35] : memref<128x256xbf16, #tpu.memory_space<vmem>>, vector<128x256xbf16>
    %cst_36 = arith.constant dense<0.000000e+00> : vector<8x256xf32>
    %50 = tpu.matmul %48, %49, %cst_36 {dimension_numbers = #tpu.dot_dimension_numbers<[1], [0], [0], [1], [0, 0, 1, 1], [], []>} : vector<8x128xbf16>, vector<128x256xbf16>, vector<8x256xf32> -> vector<8x256xf32>
    %c0_37 = arith.constant 0 : index
    %c0_38 = arith.constant 0 : index
    %51 = vector.load %arg14[%c0_37, %c0_38] : memref<1x256xf32, #tpu.memory_space<vmem>>, vector<1x256xf32>
    %52 = vector.broadcast %51 : vector<1x256xf32> to vector<8x256xf32>
    %53 = arith.addf %50, %52 : vector<8x256xf32>
    %54 = arith.negf %53 : vector<8x256xf32>
    %55 = math.exp %54 : vector<8x256xf32>
    %cst_39 = arith.constant 1.000000e+00 : f32
    %56 = vector.broadcast %cst_39 : f32 to vector<8x256xf32>
    %57 = arith.addf %56, %55 : vector<8x256xf32>
    %58 = arith.divf %56, %57 : vector<8x256xf32>
    %59 = arith.truncf %58 : vector<8x256xf32> to vector<8x256xbf16>
    %c0_40 = arith.constant 0 : index
    %c0_41 = arith.constant 0 : index
    %60 = vector.load %arg15[%c0_40, %c0_41] : memref<8x256xbf16, #tpu.memory_space<vmem>>, vector<8x256xbf16>
    tpu.vector_store %arg15[%c0_40, %c0_41], %59 {strides = array<i32>} : memref<8x256xbf16, #tpu.memory_space<vmem>>, vector<8x256xbf16>,
    return
  }
  func.func @transform_0(%arg0: i32) -> (i32, i32) {
    %c0_i32 = arith.constant 0 : i32
    %c0_i32_0 = arith.constant 0 : i32
    return %arg0, %c0_i32 : i32, i32
  }
  func.func @transform_1(%arg0: i32) -> (i32, i32) {
    %c0_i32 = arith.constant 0 : i32
    %c0_i32_0 = arith.constant 0 : i32
    return %arg0, %c0_i32 : i32, i32
  }
  func.func @transform_2(%arg0: i32) -> (i32, i32) {
    %c0_i32 = arith.constant 0 : i32
    %c0_i32_0 = arith.constant 0 : i32
    return %arg0, %c0_i32 : i32, i32
  }
  func.func @transform_3(%arg0: i32) -> (i32, i32) {
    %c0_i32 = arith.constant 0 : i32
    %c0_i32_0 = arith.constant 0 : i32
    %c0_i32_1 = arith.constant 0 : i32
    return %c0_i32, %c0_i32_0 : i32, i32
  }
  func.func @transform_4(%arg0: i32) -> (i32, i32) {
    %c0_i32 = arith.constant 0 : i32
    %c0_i32_0 = arith.constant 0 : i32
    %c0_i32_1 = arith.constant 0 : i32
    return %c0_i32, %c0_i32_0 : i32, i32
  }
  func.func @transform_5(%arg0: i32) -> (i32, i32) {
    %c0_i32 = arith.constant 0 : i32
    %c0_i32_0 = arith.constant 0 : i32
    %c0_i32_1 = arith.constant 0 : i32
    return %c0_i32, %c0_i32_0 : i32, i32
  }
  func.func @transform_6(%arg0: i32) -> (i32, i32) {
    %c0_i32 = arith.constant 0 : i32
    %c0_i32_0 = arith.constant 0 : i32
    %c0_i32_1 = arith.constant 0 : i32
    return %c0_i32, %c0_i32_0 : i32, i32
  }
  func.func @transform_7(%arg0: i32) -> (i32, i32) {
    %c0_i32 = arith.constant 0 : i32
    %c0_i32_0 = arith.constant 0 : i32
    %c0_i32_1 = arith.constant 0 : i32
    return %c0_i32, %c0_i32_0 : i32, i32
  }
  func.func @transform_8(%arg0: i32) -> (i32, i32) {
    %c0_i32 = arith.constant 0 : i32
    %c0_i32_0 = arith.constant 0 : i32
    %c0_i32_1 = arith.constant 0 : i32
    return %c0_i32, %c0_i32_0 : i32, i32
  }
  func.func @transform_9(%arg0: i32) -> (i32, i32) {
    %c0_i32 = arith.constant 0 : i32
    %c0_i32_0 = arith.constant 0 : i32
    %c0_i32_1 = arith.constant 0 : i32
    return %c0_i32, %c0_i32_0 : i32, i32
  }
  func.func @transform_10(%arg0: i32) -> (i32, i32) {
    %c0_i32 = arith.constant 0 : i32
    %c0_i32_0 = arith.constant 0 : i32
    %c0_i32_1 = arith.constant 0 : i32
    return %c0_i32, %c0_i32_0 : i32, i32
  }
  func.func @transform_11(%arg0: i32) -> (i32, i32) {
    %c0_i32 = arith.constant 0 : i32
    %c0_i32_0 = arith.constant 0 : i32
    %c0_i32_1 = arith.constant 0 : i32
    return %c0_i32, %c0_i32_0 : i32, i32
  }
  func.func @transform_12(%arg0: i32) -> (i32, i32) {
    %c0_i32 = arith.constant 0 : i32
    %c0_i32_0 = arith.constant 0 : i32
    %c0_i32_1 = arith.constant 0 : i32
    return %c0_i32, %c0_i32_0 : i32, i32
  }
  func.func @transform_13(%arg0: i32) -> (i32, i32) {
    %c0_i32 = arith.constant 0 : i32
    %c0_i32_0 = arith.constant 0 : i32
    %c0_i32_1 = arith.constant 0 : i32
    return %c0_i32, %c0_i32_0 : i32, i32
  }
  func.func @transform_14(%arg0: i32) -> (i32, i32) {
    %c0_i32 = arith.constant 0 : i32
    %c0_i32_0 = arith.constant 0 : i32
    return %arg0, %c0_i32 : i32, i32
  }
  func.func @transform_15(%arg0: i32) -> (i32, i32) {
    %c0_i32 = arith.constant 0 : i32
    %c0_i32_0 = arith.constant 0 : i32
    return %arg0, %c0_i32 : i32, i32
  }
}

module attributes {stable_mosaic.version = 11 : i64} {
  func.func @cvae_dict_kernel(%arg0: i32, %arg1: memref<8x256xf32, #tpu.memory_space<vmem>>, %arg2: memref<8x8xf32, #tpu.memory_space<vmem>>, %arg3: memref<8x8xf32, #tpu.memory_space<vmem>>, %arg4: memref<256x128xbf16, #tpu.memory_space<vmem>>, %arg5: memref<8x128xbf16, #tpu.memory_space<vmem>>, %arg6: memref<1x128xf32, #tpu.memory_space<vmem>>, %arg7: memref<128x128xbf16, #tpu.memory_space<vmem>>, %arg8: memref<1x128xf32, #tpu.memory_space<vmem>>, %arg9: memref<128x64xbf16, #tpu.memory_space<vmem>>, %arg10: memref<64x128xbf16, #tpu.memory_space<vmem>>, %arg11: memref<8x128xbf16, #tpu.memory_space<vmem>>, %arg12: memref<1x128xf32, #tpu.memory_space<vmem>>, %arg13: memref<128x256xbf16, #tpu.memory_space<vmem>>, %arg14: memref<1x256xf32, #tpu.memory_space<vmem>>, %arg15: memref<8x256xbf16, #tpu.memory_space<vmem>>, %arg16: memref<8x32xbf16, #tpu.memory_space<vmem>>) attributes {dimension_semantics = [#tpu.dimension_semantics<parallel>], iteration_bounds = array<i64: 1>, scalar_prefetch = 0 : i64, scratch_operands = 0 : i64, tpu.core_type = #tpu.core_type<tc>, window_params = [{transform_indices = @transform_0, window_bounds = array<i64: 8, 256>}, {transform_indices = @transform_1, window_bounds = array<i64: 8, 8>}, {transform_indices = @transform_2, window_bounds = array<i64: 8, 8>}, {pipeline_mode = #tpu.pipeline_mode<synchronous>, transform_indices = @transform_3, window_bounds = array<i64: 256, 128>}, {pipeline_mode = #tpu.pipeline_mode<synchronous>, transform_indices = @transform_4, window_bounds = array<i64: 8, 128>}, {pipeline_mode = #tpu.pipeline_mode<synchronous>, transform_indices = @transform_5, window_bounds = array<i64: 1, 128>}, {pipeline_mode = #tpu.pipeline_mode<synchronous>, transform_indices = @transform_6, window_bounds = array<i64: 128, 128>}, {pipeline_mode = #tpu.pipeline_mode<synchronous>, transform_indices = @transform_7, window_bounds = array<i64: 1, 128>}, {pipeline_mode = #tpu.pipeline_mode<synchronous>, transform_indices = @transform_8, window_bounds = array<i64: 128, 64>}, {pipeline_mode = #tpu.pipeline_mode<synchronous>, transform_indices = @transform_9, window_bounds = array<i64: 64, 128>}, {pipeline_mode = #tpu.pipeline_mode<synchronous>, transform_indices = @transform_10, window_bounds = array<i64: 8, 128>}, {pipeline_mode = #tpu.pipeline_mode<synchronous>, transform_indices = @transform_11, window_bounds = array<i64: 1, 128>}, {pipeline_mode = #tpu.pipeline_mode<synchronous>, transform_indices = @transform_12, window_bounds = array<i64: 128, 256>}, {pipeline_mode = #tpu.pipeline_mode<synchronous>, transform_indices = @transform_13, window_bounds = array<i64: 1, 256>}, {transform_indices = @transform_14, window_bounds = array<i64: 8, 256>}, {transform_indices = @transform_15, window_bounds = array<i64: 8, 32>}]} {
    %c0 = arith.constant 0 : index
    %c0_0 = arith.constant 0 : index
    %0 = vector.load %arg1[%c0, %c0_0] : memref<8x256xf32, #tpu.memory_space<vmem>>, vector<8x256xf32>
    %1 = arith.truncf %0 : vector<8x256xf32> to vector<8x256xbf16>
    %c0_1 = arith.constant 0 : index
    %c0_2 = arith.constant 0 : index
    %2 = vector.load %arg2[%c0_1, %c0_2] : memref<8x8xf32, #tpu.memory_space<vmem>>, vector<8x8xf32>
    %3 = arith.truncf %2 : vector<8x8xf32> to vector<8x8xbf16>
    %c0_3 = arith.constant 0 : index
    %c0_4 = arith.constant 0 : index
    %4 = vector.load %arg3[%c0_3, %c0_4] : memref<8x8xf32, #tpu.memory_space<vmem>>, vector<8x8xf32>
    %5 = arith.truncf %4 : vector<8x8xf32> to vector<8x8xbf16>
    %c0_5 = arith.constant 0 : index
    %c0_6 = arith.constant 0 : index
    %6 = vector.load %arg4[%c0_5, %c0_6] : memref<256x128xbf16, #tpu.memory_space<vmem>>, vector<256x128xbf16>
    %cst = arith.constant dense<0.000000e+00> : vector<8x128xf32>
    %7 = tpu.matmul %1, %6, %cst {dimension_numbers = #tpu.dot_dimension_numbers<[1], [0], [0], [1], [0, 0, 1, 1], [], []>} : vector<8x256xbf16>, vector<256x128xbf16>, vector<8x128xf32> -> vector<8x128xf32>
    %c0_7 = arith.constant 0 : index
    %c0_8 = arith.constant 0 : index
    %8 = vector.load %arg5[%c0_7, %c0_8] : memref<8x128xbf16, #tpu.memory_space<vmem>>, vector<8x128xbf16>
    %cst_9 = arith.constant dense<0.000000e+00> : vector<8x128xf32>
    %9 = tpu.matmul %3, %8, %cst_9 {dimension_numbers = #tpu.dot_dimension_numbers<[1], [0], [0], [1], [0, 0, 1, 1], [], []>} : vector<8x8xbf16>, vector<8x128xbf16>, vector<8x128xf32> -> vector<8x128xf32>
    %10 = arith.addf %7, %9 : vector<8x128xf32>
    %c0_10 = arith.constant 0 : index
    %c0_11 = arith.constant 0 : index
    %11 = vector.load %arg6[%c0_10, %c0_11] : memref<1x128xf32, #tpu.memory_space<vmem>>, vector<1x128xf32>
    %12 = vector.broadcast %11 : vector<1x128xf32> to vector<8x128xf32>
    %13 = arith.addf %10, %12 : vector<8x128xf32>
    %cst_12 = arith.constant 0.000000e+00 : f32
    %14 = vector.broadcast %cst_12 : f32 to vector<8x128xf32>
    %15 = arith.maximumf %13, %14 : vector<8x128xf32>
    %16 = arith.truncf %15 : vector<8x128xf32> to vector<8x128xbf16>
    %c0_13 = arith.constant 0 : index
    %c0_14 = arith.constant 0 : index
    %17 = vector.load %arg7[%c0_13, %c0_14] : memref<128x128xbf16, #tpu.memory_space<vmem>>, vector<128x128xbf16>
    %cst_15 = arith.constant dense<0.000000e+00> : vector<8x128xf32>
    %18 = tpu.matmul %16, %17, %cst_15 {dimension_numbers = #tpu.dot_dimension_numbers<[1], [0], [0], [1], [0, 0, 1, 1], [], []>} : vector<8x128xbf16>, vector<128x128xbf16>, vector<8x128xf32> -> vector<8x128xf32>
    %c0_16 = arith.constant 0 : index
    %c0_17 = arith.constant 0 : index
    %19 = vector.load %arg8[%c0_16, %c0_17] : memref<1x128xf32, #tpu.memory_space<vmem>>, vector<1x128xf32>
    %20 = vector.broadcast %19 : vector<1x128xf32> to vector<8x128xf32>
    %21 = arith.addf %18, %20 : vector<8x128xf32>
    %cst_18 = arith.constant dense<0xFF800000> : vector<8xf32>
    %22 = vector.multi_reduction <maximumf>, %21, %cst_18 [1] : vector<8x128xf32> to vector<8xf32>
    %23 = vector.shape_cast %22 : vector<8xf32> to vector<8x1xf32>
    %24 = vector.broadcast %23 : vector<8x1xf32> to vector<8x128xf32>
    %25 = arith.subf %21, %24 : vector<8x128xf32>
    %26 = math.exp %25 : vector<8x128xf32>
    %cst_19 = arith.constant dense<0.000000e+00> : vector<8xf32>
    %27 = vector.multi_reduction <add>, %26, %cst_19 [1] : vector<8x128xf32> to vector<8xf32>
    %28 = vector.shape_cast %27 : vector<8xf32> to vector<8x1xf32>
    %29 = vector.broadcast %28 : vector<8x1xf32> to vector<8x128xf32>
    %30 = arith.divf %26, %29 : vector<8x128xf32>
    %31 = vector.extract_strided_slice %30 {offsets = [0, 0], sizes = [8, 32], strides = [1, 1]} : vector<8x128xf32> to vector<8x32xf32>
    %32 = arith.truncf %31 : vector<8x32xf32> to vector<8x32xbf16>
    %c0_20 = arith.constant 0 : index
    %c0_21 = arith.constant 0 : index
    %33 = vector.load %arg16[%c0_20, %c0_21] : memref<8x32xbf16, #tpu.memory_space<vmem>>, vector<8x32xbf16>
    tpu.vector_store %arg16[%c0_20, %c0_21], %32 {strides = array<i32>} : memref<8x32xbf16, #tpu.memory_space<vmem>>, vector<8x32xbf16>,
    %34 = arith.truncf %30 : vector<8x128xf32> to vector<8x128xbf16>
    %c0_22 = arith.constant 0 : index
    %c0_23 = arith.constant 0 : index
    %35 = vector.load %arg9[%c0_22, %c0_23] : memref<128x64xbf16, #tpu.memory_space<vmem>>, vector<128x64xbf16>
    %cst_24 = arith.constant dense<0.000000e+00> : vector<8x64xf32>
    %36 = tpu.matmul %34, %35, %cst_24 {dimension_numbers = #tpu.dot_dimension_numbers<[1], [0], [0], [1], [0, 0, 1, 1], [], []>} : vector<8x128xbf16>, vector<128x64xbf16>, vector<8x64xf32> -> vector<8x64xf32>
    %37 = arith.truncf %36 : vector<8x64xf32> to vector<8x64xbf16>
    %c0_25 = arith.constant 0 : index
    %c0_26 = arith.constant 0 : index
    %38 = vector.load %arg10[%c0_25, %c0_26] : memref<64x128xbf16, #tpu.memory_space<vmem>>, vector<64x128xbf16>
    %cst_27 = arith.constant dense<0.000000e+00> : vector<8x128xf32>
    %39 = tpu.matmul %37, %38, %cst_27 {dimension_numbers = #tpu.dot_dimension_numbers<[1], [0], [0], [1], [0, 0, 1, 1], [], []>} : vector<8x64xbf16>, vector<64x128xbf16>, vector<8x128xf32> -> vector<8x128xf32>
    %c0_28 = arith.constant 0 : index
    %c0_29 = arith.constant 0 : index
    %40 = vector.load %arg11[%c0_28, %c0_29] : memref<8x128xbf16, #tpu.memory_space<vmem>>, vector<8x128xbf16>
    %cst_30 = arith.constant dense<0.000000e+00> : vector<8x128xf32>
    %41 = tpu.matmul %5, %40, %cst_30 {dimension_numbers = #tpu.dot_dimension_numbers<[1], [0], [0], [1], [0, 0, 1, 1], [], []>} : vector<8x8xbf16>, vector<8x128xbf16>, vector<8x128xf32> -> vector<8x128xf32>
    %42 = arith.addf %39, %41 : vector<8x128xf32>
    %c0_31 = arith.constant 0 : index
    %c0_32 = arith.constant 0 : index
    %43 = vector.load %arg12[%c0_31, %c0_32] : memref<1x128xf32, #tpu.memory_space<vmem>>, vector<1x128xf32>
    %44 = vector.broadcast %43 : vector<1x128xf32> to vector<8x128xf32>
    %45 = arith.addf %42, %44 : vector<8x128xf32>
    %cst_33 = arith.constant 0.000000e+00 : f32
    %46 = vector.broadcast %cst_33 : f32 to vector<8x128xf32>
    %47 = arith.maximumf %45, %46 : vector<8x128xf32>
    %48 = arith.truncf %47 : vector<8x128xf32> to vector<8x128xbf16>
    %c0_34 = arith.constant 0 : index
    %c0_35 = arith.constant 0 : index
    %49 = vector.load %arg13[%c0_34, %c0_35] : memref<128x256xbf16, #tpu.memory_space<vmem>>, vector<128x256xbf16>
    %cst_36 = arith.constant dense<0.000000e+00> : vector<8x256xf32>
    %50 = tpu.matmul %48, %49, %cst_36 {dimension_numbers = #tpu.dot_dimension_numbers<[1], [0], [0], [1], [0, 0, 1, 1], [], []>} : vector<8x128xbf16>, vector<128x256xbf16>, vector<8x256xf32> -> vector<8x256xf32>
    %c0_37 = arith.constant 0 : index
    %c0_38 = arith.constant 0 : index
    %51 = vector.load %arg14[%c0_37, %c0_38] : memref<1x256xf32, #tpu.memory_space<vmem>>, vector<1x256xf32>
    %52 = vector.broadcast %51 : vector<1x256xf32> to vector<8x256xf32>
    %53 = arith.addf %50, %52 : vector<8x256xf32>
    %54 = arith.negf %53 : vector<8x256xf32>
    %55 = math.exp %54 : vector<8x256xf32>
    %cst_39 = arith.constant 1.000000e+00 : f32
    %56 = vector.broadcast %cst_39 : f32 to vector<8x256xf32>
    %57 = arith.addf %56, %55 : vector<8x256xf32>
    %58 = arith.divf %56, %57 : vector<8x256xf32>
    %59 = arith.truncf %58 : vector<8x256xf32> to vector<8x256xbf16>
    %c0_40 = arith.constant 0 : index
    %c0_41 = arith.constant 0 : index
    %60 = vector.load %arg15[%c0_40, %c0_41] : memref<8x256xbf16, #tpu.memory_space<vmem>>, vector<8x256xbf16>
    tpu.vector_store %arg15[%c0_40, %c0_41], %59 {strides = array<i32>} : memref<8x256xbf16, #tpu.memory_space<vmem>>, vector<8x256xbf16>,
    return
  }
  func.func @transform_0(%arg0: i32) -> (i32, i32) {
    %c0_i32 = arith.constant 0 : i32
    %c0_i32_0 = arith.constant 0 : i32
    return %arg0, %c0_i32 : i32, i32
  }
  func.func @transform_1(%arg0: i32) -> (i32, i32) {
    %c0_i32 = arith.constant 0 : i32
    %c0_i32_0 = arith.constant 0 : i32
    return %arg0, %c0_i32 : i32, i32
  }
  func.func @transform_2(%arg0: i32) -> (i32, i32) {
    %c0_i32 = arith.constant 0 : i32
    %c0_i32_0 = arith.constant 0 : i32
    return %arg0, %c0_i32 : i32, i32
  }
  func.func @transform_3(%arg0: i32) -> (i32, i32) {
    %c0_i32 = arith.constant 0 : i32
    %c0_i32_0 = arith.constant 0 : i32
    %c0_i32_1 = arith.constant 0 : i32
    return %c0_i32, %c0_i32_0 : i32, i32
  }
  func.func @transform_4(%arg0: i32) -> (i32, i32) {
    %c0_i32 = arith.constant 0 : i32
    %c0_i32_0 = arith.constant 0 : i32
    %c0_i32_1 = arith.constant 0 : i32
    return %c0_i32, %c0_i32_0 : i32, i32
  }
  func.func @transform_5(%arg0: i32) -> (i32, i32) {
    %c0_i32 = arith.constant 0 : i32
    %c0_i32_0 = arith.constant 0 : i32
    %c0_i32_1 = arith.constant 0 : i32
    return %c0_i32, %c0_i32_0 : i32, i32
  }
  func.func @transform_6(%arg0: i32) -> (i32, i32) {
    %c0_i32 = arith.constant 0 : i32
    %c0_i32_0 = arith.constant 0 : i32
    %c0_i32_1 = arith.constant 0 : i32
    return %c0_i32, %c0_i32_0 : i32, i32
  }
  func.func @transform_7(%arg0: i32) -> (i32, i32) {
    %c0_i32 = arith.constant 0 : i32
    %c0_i32_0 = arith.constant 0 : i32
    %c0_i32_1 = arith.constant 0 : i32
    return %c0_i32, %c0_i32_0 : i32, i32
  }
  func.func @transform_8(%arg0: i32) -> (i32, i32) {
    %c0_i32 = arith.constant 0 : i32
    %c0_i32_0 = arith.constant 0 : i32
    %c0_i32_1 = arith.constant 0 : i32
    return %c0_i32, %c0_i32_0 : i32, i32
  }
  func.func @transform_9(%arg0: i32) -> (i32, i32) {
    %c0_i32 = arith.constant 0 : i32
    %c0_i32_0 = arith.constant 0 : i32
    %c0_i32_1 = arith.constant 0 : i32
    return %c0_i32, %c0_i32_0 : i32, i32
  }
  func.func @transform_10(%arg0: i32) -> (i32, i32) {
    %c0_i32 = arith.constant 0 : i32
    %c0_i32_0 = arith.constant 0 : i32
    %c0_i32_1 = arith.constant 0 : i32
    return %c0_i32, %c0_i32_0 : i32, i32
  }
  func.func @transform_11(%arg0: i32) -> (i32, i32) {
    %c0_i32 = arith.constant 0 : i32
    %c0_i32_0 = arith.constant 0 : i32
    %c0_i32_1 = arith.constant 0 : i32
    return %c0_i32, %c0_i32_0 : i32, i32
  }
  func.func @transform_12(%arg0: i32) -> (i32, i32) {
    %c0_i32 = arith.constant 0 : i32
    %c0_i32_0 = arith.constant 0 : i32
    %c0_i32_1 = arith.constant 0 : i32
    return %c0_i32, %c0_i32_0 : i32, i32
  }
  func.func @transform_13(%arg0: i32) -> (i32, i32) {
    %c0_i32 = arith.constant 0 : i32
    %c0_i32_0 = arith.constant 0 : i32
    %c0_i32_1 = arith.constant 0 : i32
    return %c0_i32, %c0_i32_0 : i32, i32
  }
  func.func @transform_14(%arg0: i32) -> (i32, i32) {
    %c0_i32 = arith.constant 0 : i32
    %c0_i32_0 = arith.constant 0 : i32
    return %arg0, %c0_i32 : i32, i32
  }
  func.func @transform_15(%arg0: i32) -> (i32, i32) {
    %c0_i32 = arith.constant 0 : i32
    %c0_i32_0 = arith.constant 0 : i32
    return %arg0, %c0_i32 : i32, i32
  }
}

</mosaic_0001>

<llo_original>
// kernel: tpu_custom_call.1
$region0: #{tpu_custom_call.1}
  #allocation0 [shape = 'u32[]', space=smem, size = 0x4, offset = 0x4, fixed_abs, tag = 'smem constant byte address 0x4 - core index']
  #allocation1 [shape = 'u32[144,128]{1,0:T(1,128)}', space=vmem, size = 0x12000, scoped, tag = 'internal scratch']
  %s0 = inlined_call_operand.hbm [shape: f32[8,256], index: 0, kind: input, shape index: {}]
  %s1 = inlined_call_operand.vmem [shape: f32[8,8], index: 1, kind: input, shape index: {}]
  %s2 = inlined_call_operand.hbm [shape: f32[8,8], index: 2, kind: input, shape index: {}]
  %s3 = inlined_call_operand.hbm [shape: bf16[256,128], index: 3, kind: input, shape index: {}]
  %s4 = inlined_call_operand.hbm [shape: bf16[8,128], index: 4, kind: input, shape index: {}]
  %s5 = inlined_call_operand.hbm [shape: f32[1,128], index: 5, kind: input, shape index: {}]
  %s6 = inlined_call_operand.vmem [shape: bf16[128,128], index: 6, kind: input, shape index: {}]
  %s7 = inlined_call_operand.hbm [shape: f32[1,128], index: 7, kind: input, shape index: {}]
  %s8 = inlined_call_operand.vmem [shape: bf16[128,64], index: 8, kind: input, shape index: {}]
  %s9 = inlined_call_operand.vmem [shape: bf16[64,128], index: 9, kind: input, shape index: {}]
  %s10 = inlined_call_operand.vmem [shape: bf16[8,128], index: 10, kind: input, shape index: {}]
  %s11 = inlined_call_operand.vmem [shape: f32[1,128], index: 11, kind: input, shape index: {}]
  %s12 = inlined_call_operand.hbm [shape: bf16[128,256], index: 12, kind: input, shape index: {}]
  %s13 = inlined_call_operand.vmem [shape: f32[1,256], index: 13, kind: input, shape index: {}]
  %s14 = inlined_call_operand.hbm [shape: bf16[8,256], index: 14, kind: output, shape index: {0}]
  %s15 = inlined_call_operand.hbm [shape: bf16[8,32], index: 15, kind: output, shape index: {1}]
  %16 = xla_tuple %s14, %s15
  %s17 = sld [smem:[#allocation0]]
  $region102: #{tpu_custom_call.1} parent=0
    _
  %s19 = ssub.s32 1, %s17
  %s20 = scalar_select 0, %s19, %s17
  $region1: #{tpu_custom_call.1} parent=0
    #allocation2 [shape = 'u8[8192]{0}', space=vmem, size = 0x2000, scoped, tag = 'input window, operand 0, single buffered']
    #allocation3 [shape = 's32[1]{0}', space=sflag, size = 0x4, scoped, tag = 'scoped memory for tpu_custom_call.1']
    #allocation4 [shape = 's32[1]{0}', space=sflag, size = 0x4, scoped, tag = 'scoped memory for tpu_custom_call.1']
    #allocation5 [shape = 'u8[4096]{0}', space=vmem, size = 0x1000, scoped, tag = 'input window, operand 2, single buffered']
    #allocation6 [shape = 's32[1]{0}', space=sflag, size = 0x4, scoped, tag = 'scoped memory for tpu_custom_call.1']
    #allocation7 [shape = 'u8[65536]{0}', space=vmem, size = 0x10000, scoped, tag = 'input window, operand 3, single buffered']
    #allocation8 [shape = 'u8[2048]{0}', space=vmem, size = 0x800, scoped, tag = 'input window, operand 4, single buffered']
    #allocation9 [shape = 's32[1]{0}', space=sflag, size = 0x4, scoped, tag = 'scoped memory for tpu_custom_call.1']
    #allocation10 [shape = 'u8[512]{0}', space=vmem, size = 0x400, scoped, tag = 'input window, operand 5, single buffered']
    #allocation11 [shape = 'u8[512]{0}', space=vmem, size = 0x400, scoped, tag = 'input window, operand 7, single buffered']
    #allocation12 [shape = 's32[1]{0}', space=sflag, size = 0x4, scoped, tag = 'scoped memory for tpu_custom_call.1']
    #allocation13 [shape = 'u8[65536]{0}', space=vmem, size = 0x10000, scoped, tag = 'input window, operand 12, single buffered']
    #allocation14 [shape = 'u8[4096]{0}', space=vmem, size = 0x1000, scoped, tag = 'output window, operand 0, single buffered']
    #allocation15 [shape = 'u8[2048]{0}', space=vmem, size = 0x800, scoped, tag = 'output window, operand 1, single buffered']
    #allocation16 [shape = 's32[1]{0}', space=sflag, size = 0x4, scoped, tag = 'scoped memory for tpu_custom_call.1']
    %21 = vsyncpa [#allocation3], 0
    %22 = vsyncpa [#allocation6], 0
    %23 = vsyncpa [#allocation9], 0
    %24 = vsyncpa [#allocation12], 0
    %25 = vsyncpa [#allocation4], 0
    %26 = vsyncpa [#allocation16], 0
    // Predicated region
    $region2: #{tpu_custom_call.1} parent=1 // pred_check
      _
    $region3: #{tpu_custom_call.1} parent=1 // pred_check_branch
      %28 = sbr.rel (0) target = $region5
    $region4: #{tpu_custom_call.1} parent=1 // pred_region
      %s30 = ssub.s32 256, 256
      %31 = vsyncadd [#allocation3], %s30
      %s33 = sshll.u32 [#allocation2], 4
      %s34 = int_to_ptr.vmem [resolvable:$true] %s33
      %36 = dma.hbm_to_vmem [thread:$0]  %s0, 256, %s34, [#allocation3]
    $region5: #{tpu_custom_call.1} parent=1 // pred_fallthru
      _
    // Predicated region
    $region6: #{tpu_custom_call.1} parent=1 // pred_check
      _
    $region7: #{tpu_custom_call.1} parent=1 // pred_check_branch
      %38 = sbr.rel (0) target = $region9
    $region8: #{tpu_custom_call.1} parent=1 // pred_region
      _
    $region9: #{tpu_custom_call.1} parent=1 // pred_fallthru
      _
    // Predicated region
    $region10: #{tpu_custom_call.1} parent=1 // pred_check
      _
    $region11: #{tpu_custom_call.1} parent=1 // pred_check_branch
      %40 = sbr.rel (0) target = $region13
    $region12: #{tpu_custom_call.1} parent=1 // pred_region
      %s42 = ssub.s32 128, 128
      %43 = vsyncadd [#allocation6], %s42
      %s45 = sshll.u32 [#allocation5], 4
      %s46 = int_to_ptr.vmem [resolvable:$true] %s45
      %48 = dma.hbm_to_vmem [thread:$0]  %s2, 128, %s46, [#allocation6]
    $region13: #{tpu_custom_call.1} parent=1 // pred_fallthru
      _
    // Predicated region
    $region14: #{tpu_custom_call.1} parent=1 // pred_check
      _
    $region15: #{tpu_custom_call.1} parent=1 // pred_check_branch
      %50 = sbr.rel (0) target = $region17
    $region16: #{tpu_custom_call.1} parent=1 // pred_region
      %s52 = ssub.s32 2048, 2048
      %53 = vsyncadd [#allocation6], %s52
      %s54 = sshll.u32 [#allocation7], 4
      %s55 = int_to_ptr.vmem [resolvable:$true] %s54
      %60 = dma.hbm_to_vmem [thread:$0]  %s3, 2048, %s55, [#allocation6], 64, 64, 4
    $region17: #{tpu_custom_call.1} parent=1 // pred_fallthru
      _
    // Predicated region
    $region18: #{tpu_custom_call.1} parent=1 // pred_check
      _
    $region19: #{tpu_custom_call.1} parent=1 // pred_check_branch
      %62 = sbr.rel (0) target = $region21
    $region20: #{tpu_custom_call.1} parent=1 // pred_region
      %s64 = ssub.s32 64, 64
      %65 = vsyncadd [#allocation9], %s64
      %s67 = sshll.u32 [#allocation8], 4
      %s68 = int_to_ptr.vmem [resolvable:$true] %s67
      %70 = dma.hbm_to_vmem [thread:$0]  %s4, 64, %s68, [#allocation9]
    $region21: #{tpu_custom_call.1} parent=1 // pred_fallthru
      _
    // Predicated region
    $region22: #{tpu_custom_call.1} parent=1 // pred_check
      _
    $region23: #{tpu_custom_call.1} parent=1 // pred_check_branch
      %72 = sbr.rel (0) target = $region25
    $region24: #{tpu_custom_call.1} parent=1 // pred_region
      %s74 = ssub.s32 16, 16
      %75 = vsyncadd [#allocation9], %s74
      %s77 = sshll.u32 [#allocation10], 4
      %s78 = int_to_ptr.vmem [resolvable:$true] %s77
      %80 = dma.hbm_to_vmem [thread:$0]  %s5, 16, %s78, [#allocation9]
    $region25: #{tpu_custom_call.1} parent=1 // pred_fallthru
      _
    // Predicated region
    $region26: #{tpu_custom_call.1} parent=1 // pred_check
      _
    $region27: #{tpu_custom_call.1} parent=1 // pred_check_branch
      %82 = sbr.rel (0) target = $region29
    $region28: #{tpu_custom_call.1} parent=1 // pred_region
      _
    $region29: #{tpu_custom_call.1} parent=1 // pred_fallthru
      _
    // Predicated region
    $region30: #{tpu_custom_call.1} parent=1 // pred_check
      _
    $region31: #{tpu_custom_call.1} parent=1 // pred_check_branch
      %84 = sbr.rel (0) target = $region33
    $region32: #{tpu_custom_call.1} parent=1 // pred_region
      %s86 = ssub.s32 16, 16
      %87 = vsyncadd [#allocation12], %s86
      %s89 = sshll.u32 [#allocation11], 4
      %s90 = int_to_ptr.vmem [resolvable:$true] %s89
      %92 = dma.hbm_to_vmem [thread:$0]  %s7, 16, %s90, [#allocation12]
    $region33: #{tpu_custom_call.1} parent=1 // pred_fallthru
      _
    // Predicated region
    $region34: #{tpu_custom_call.1} parent=1 // pred_check
      _
    $region35: #{tpu_custom_call.1} parent=1 // pred_check_branch
      %94 = sbr.rel (0) target = $region37
    $region36: #{tpu_custom_call.1} parent=1 // pred_region
      _
    $region37: #{tpu_custom_call.1} parent=1 // pred_fallthru
      _
    // Predicated region
    $region38: #{tpu_custom_call.1} parent=1 // pred_check
      _
    $region39: #{tpu_custom_call.1} parent=1 // pred_check_branch
      %96 = sbr.rel (0) target = $region41
    $region40: #{tpu_custom_call.1} parent=1 // pred_region
      _
    $region41: #{tpu_custom_call.1} parent=1 // pred_fallthru
      _
    // Predicated region
    $region42: #{tpu_custom_call.1} parent=1 // pred_check
      _
    $region43: #{tpu_custom_call.1} parent=1 // pred_check_branch
      %98 = sbr.rel (0) target = $region45
    $region44: #{tpu_custom_call.1} parent=1 // pred_region
      _
    $region45: #{tpu_custom_call.1} parent=1 // pred_fallthru
      _
    // Predicated region
    $region46: #{tpu_custom_call.1} parent=1 // pred_check
      _
    $region47: #{tpu_custom_call.1} parent=1 // pred_check_branch
      %100 = sbr.rel (0) target = $region49
    $region48: #{tpu_custom_call.1} parent=1 // pred_region
      _
    $region49: #{tpu_custom_call.1} parent=1 // pred_fallthru
      _
    // Predicated region
    $region50: #{tpu_custom_call.1} parent=1 // pred_check
      _
    $region51: #{tpu_custom_call.1} parent=1 // pred_check_branch
      %102 = sbr.rel (0) target = $region53
    $region52: #{tpu_custom_call.1} parent=1 // pred_region
      %s104 = ssub.s32 2048, 2048
      %105 = vsyncadd [#allocation12], %s104
      %s106 = sshll.u32 [#allocation13], 4
      %s107 = int_to_ptr.vmem [resolvable:$true] %s106
      %112 = dma.hbm_to_vmem [thread:$0]  %s12, 2048, %s107, [#allocation12], 128, 128, 8
    $region53: #{tpu_custom_call.1} parent=1 // pred_fallthru
      _
    // Predicated region
    $region54: #{tpu_custom_call.1} parent=1 // pred_check
      _
    $region55: #{tpu_custom_call.1} parent=1 // pred_check_branch
      %114 = sbr.rel (0) target = $region57
    $region56: #{tpu_custom_call.1} parent=1 // pred_region
      _
    $region57: #{tpu_custom_call.1} parent=1 // pred_fallthru
      _
    // Predicated region
    $region58: #{tpu_custom_call.1} parent=1 // pred_check
      _
    $region59: #{tpu_custom_call.1} parent=1 // pred_check_branch
      %116 = sbr.rel (0) target = $region61
    $region60: #{tpu_custom_call.1} parent=1 // pred_region
      %117 = dma.done [#allocation3], 256
    $region61: #{tpu_custom_call.1} parent=1 // pred_fallthru
      _
    // Predicated region
    $region62: #{tpu_custom_call.1} parent=1 // pred_check
      _
    $region63: #{tpu_custom_call.1} parent=1 // pred_check_branch
      %119 = sbr.rel (0) target = $region65
    $region64: #{tpu_custom_call.1} parent=1 // pred_region
      %120 = dma.done [#allocation6], 128
    $region65: #{tpu_custom_call.1} parent=1 // pred_fallthru
      _
    // Predicated region
    $region66: #{tpu_custom_call.1} parent=1 // pred_check
      _
    $region67: #{tpu_custom_call.1} parent=1 // pred_check_branch
      %122 = sbr.rel (0) target = $region69
    $region68: #{tpu_custom_call.1} parent=1 // pred_region
      %123 = dma.done [#allocation6], 2048
    $region69: #{tpu_custom_call.1} parent=1 // pred_fallthru
      _
    // Predicated region
    $region70: #{tpu_custom_call.1} parent=1 // pred_check
      _
    $region71: #{tpu_custom_call.1} parent=1 // pred_check_branch
      %125 = sbr.rel (0) target = $region73
    $region72: #{tpu_custom_call.1} parent=1 // pred_region
      %126 = dma.done [#allocation9], 64
    $region73: #{tpu_custom_call.1} parent=1 // pred_fallthru
      _
    // Predicated region
    $region74: #{tpu_custom_call.1} parent=1 // pred_check
      _
    $region75: #{tpu_custom_call.1} parent=1 // pred_check_branch
      %128 = sbr.rel (0) target = $region77
    $region76: #{tpu_custom_call.1} parent=1 // pred_region
      %129 = dma.done [#allocation9], 16
    $region77: #{tpu_custom_call.1} parent=1 // pred_fallthru
      _
    // Predicated region
    $region78: #{tpu_custom_call.1} parent=1 // pred_check
      _
    $region79: #{tpu_custom_call.1} parent=1 // pred_check_branch
      %131 = sbr.rel (0) target = $region81
    $region80: #{tpu_custom_call.1} parent=1 // pred_region
      %132 = dma.done [#allocation12], 16
    $region81: #{tpu_custom_call.1} parent=1 // pred_fallthru
      _
    // Predicated region
    $region82: #{tpu_custom_call.1} parent=1 // pred_check
      _
    $region83: #{tpu_custom_call.1} parent=1 // pred_check_branch
      %134 = sbr.rel (0) target = $region85
    $region84: #{tpu_custom_call.1} parent=1 // pred_region
      %135 = dma.done [#allocation12], 2048
    $region85: #{tpu_custom_call.1} parent=1 // pred_fallthru
      _
    %v137 = vld [vmem:[#allocation2] sm:$0xff]
    %v138 = vld [vmem:[#allocation2 + $0x8] sm:$0xff]
    %v139 = vpack.c.bf16 %v137, %v137
    %v140 = vpack.c.bf16 %v138, %v138
    %v141 = vld [vmem:[%s1] sm:$0xff]
    %v142 = vpack.c.bf16 %v141, %v141
    %v143 = vld [vmem:[#allocation5] sm:$0xff]
    %v144 = vpack.c.bf16 %v143, %v143
    %v145 = vld [vmem:[#allocation7] sm:$0xf]
    %v146 = vld [vmem:[#allocation7 + $0x4] sm:$0xf]
    %v147 = vld [vmem:[#allocation7 + $0x8] sm:$0xf]
    %v148 = vld [vmem:[#allocation7 + $0xc] sm:$0xf]
    %v149 = vld [vmem:[#allocation7 + $0x10] sm:$0xf]
    %v150 = vld [vmem:[#allocation7 + $0x14] sm:$0xf]
    %v151 = vld [vmem:[#allocation7 + $0x18] sm:$0xf]
    %v152 = vld [vmem:[#allocation7 + $0x1c] sm:$0xf]
    %v153 = vld [vmem:[#allocation7 + $0x20] sm:$0xf]
    %v154 = vld [vmem:[#allocation7 + $0x24] sm:$0xf]
    %v155 = vld [vmem:[#allocation7 + $0x28] sm:$0xf]
    %v156 = vld [vmem:[#allocation7 + $0x2c] sm:$0xf]
    %v157 = vld [vmem:[#allocation7 + $0x30] sm:$0xf]
    %v158 = vld [vmem:[#allocation7 + $0x34] sm:$0xf]
    %v159 = vld [vmem:[#allocation7 + $0x38] sm:$0xf]
    %v160 = vld [vmem:[#allocation7 + $0x3c] sm:$0xf]
    %v161 = vld [vmem:[#allocation7 + $0x40] sm:$0xf]
    %v162 = vld [vmem:[#allocation7 + $0x44] sm:$0xf]
    %v163 = vld [vmem:[#allocation7 + $0x48] sm:$0xf]
    %v164 = vld [vmem:[#allocation7 + $0x4c] sm:$0xf]
    %v165 = vld [vmem:[#allocation7 + $0x50] sm:$0xf]
    %v166 = vld [vmem:[#allocation7 + $0x54] sm:$0xf]
    %v167 = vld [vmem:[#allocation7 + $0x58] sm:$0xf]
    %v168 = vld [vmem:[#allocation7 + $0x5c] sm:$0xf]
    %v169 = vld [vmem:[#allocation7 + $0x60] sm:$0xf]
    %v170 = vld [vmem:[#allocation7 + $0x64] sm:$0xf]
    %v171 = vld [vmem:[#allocation7 + $0x68] sm:$0xf]
    %v172 = vld [vmem:[#allocation7 + $0x6c] sm:$0xf]
    %v173 = vld [vmem:[#allocation7 + $0x70] sm:$0xf]
    %v174 = vld [vmem:[#allocation7 + $0x74] sm:$0xf]
    %v175 = vld [vmem:[#allocation7 + $0x78] sm:$0xf]
    %v176 = vld [vmem:[#allocation7 + $0x7c] sm:$0xf]
    %v177 = vld [vmem:[#allocation8] sm:$0xf]
    %vm178 = vcmask 64512
    %v180 = vsel %vm178, %v142, 0
    %vm182 = vcmask 1043456
    %v184 = vsel %vm182, %v177, 0
    %186 = vmatprep.subr.bf16.mxu0 0
    %187 = vmatpush1.bf16.msra.mxu0 0
    %188 = vmatprep.subr.bf16.mxu0 0
    %189 = vmatpush1.bf16.msra.mxu0 0
    %190 = vmatprep.subr.bf16.mxu0 0
    %191 = vmatpush1.bf16.msra.mxu0 0
    %192 = vmatprep.subr.bf16.mxu0 0
    %193 = vmatpush1.bf16.msra.mxu0 0
    %194 = vmatprep.subr.bf16.mxu0 0
    %195 = vmatpush1.bf16.msra.mxu0 0
    %196 = vmatprep.subr.bf16.mxu0 0
    %197 = vmatpush1.bf16.msra.mxu0 0
    %198 = vmatprep.subr.bf16.mxu0 0
    %199 = vmatpush1.bf16.msra.mxu0 0
    %200 = vmatprep.subr.bf16.mxu0 0
    %201 = vmatpush1.bf16.msra.mxu0 %v184
    %202 = vmatprep.subr.bf16.mxu0 0
    %203 = vmatpush2.bf16.msra.mxu0 0
    %204 = vmatprep.subr.bf16.mxu0 0
    %205 = vmatpush2.bf16.msra.mxu0 0
    %206 = vmatprep.subr.bf16.mxu0 0
    %207 = vmatpush2.bf16.msra.mxu0 0
    %208 = vmatprep.subr.bf16.mxu0 0
    %209 = vmatpush2.bf16.msra.mxu0 0
    %210 = vmatprep.subr.bf16.mxu0 0
    %211 = vmatpush2.bf16.msra.mxu0 0
    %212 = vmatprep.subr.bf16.mxu0 0
    %213 = vmatpush2.bf16.msra.mxu0 0
    %214 = vmatprep.subr.bf16.mxu0 0
    %215 = vmatpush2.bf16.msra.mxu0 0
    %216 = vmatprep.subr.bf16.mxu0 0
    %217 = vmatpush2.bf16.msra.mxu0 0
    %218 = vmatprep.mubr.bf16.mxu0 0
    %219 = vmatmul.mubr.bf16.gmra.mxu0 %v180
    %v220 = vpop.f32.mrf.mxu0
    %v221 = vadd.f32 0.0, %v220
    %v222 = vpop.f32.mrf.mxu0
    %v223 = vpop.f32.mrf.mxu0
    %v224 = vpop.f32.mrf.mxu0
    %225 = vdwg.mxu0
    %v258 = vunpack.c.l.b16 %v145
    %v259 = vunpack.c.l.b16 %v146
    %v260 = vunpack.c.l.b16 %v147
    %v261 = vunpack.c.l.b16 %v148
    %v262 = vunpack.c.l.b16 %v149
    %v263 = vunpack.c.l.b16 %v150
    %v264 = vunpack.c.l.b16 %v151
    %v265 = vunpack.c.l.b16 %v152
    %v266 = vunpack.c.l.b16 %v153
    %v267 = vunpack.c.l.b16 %v154
    %v268 = vunpack.c.l.b16 %v155
    %v269 = vunpack.c.l.b16 %v156
    %v270 = vunpack.c.l.b16 %v157
    %v271 = vunpack.c.l.b16 %v158
    %v272 = vunpack.c.l.b16 %v159
    %v273 = vunpack.c.l.b16 %v160
    %v274 = vunpack.c.l.b16 %v161
    %v275 = vunpack.c.l.b16 %v162
    %v276 = vunpack.c.l.b16 %v163
    %v277 = vunpack.c.l.b16 %v164
    %v278 = vunpack.c.l.b16 %v165
    %v279 = vunpack.c.l.b16 %v166
    %v280 = vunpack.c.l.b16 %v167
    %v281 = vunpack.c.l.b16 %v168
    %v282 = vunpack.c.l.b16 %v169
    %v283 = vunpack.c.l.b16 %v170
    %v284 = vunpack.c.l.b16 %v171
    %v285 = vunpack.c.l.b16 %v172
    %v286 = vunpack.c.l.b16 %v173
    %v287 = vunpack.c.l.b16 %v174
    %v288 = vunpack.c.l.b16 %v175
    %v289 = vunpack.c.l.b16 %v176
    %v290 = vpack.c.b16 %v259, %v258
    %v291 = vpack.c.b16 %v261, %v260
    %v292 = vpack.c.b16 %v263, %v262
    %v293 = vpack.c.b16 %v265, %v264
    %v294 = vpack.c.b16 %v267, %v266
    %v295 = vpack.c.b16 %v269, %v268
    %v296 = vpack.c.b16 %v271, %v270
    %v297 = vpack.c.b16 %v273, %v272
    %v298 = vpack.c.b16 %v275, %v274
    %v299 = vpack.c.b16 %v277, %v276
    %v300 = vpack.c.b16 %v279, %v278
    %v301 = vpack.c.b16 %v281, %v280
    %v302 = vpack.c.b16 %v283, %v282
    %v303 = vpack.c.b16 %v285, %v284
    %v304 = vpack.c.b16 %v287, %v286
    %v305 = vpack.c.b16 %v289, %v288
    %322 = vmatprep.subr.bf16.mxu0 0
    %323 = vmatpush1.bf16.msra.mxu0 %v297
    %324 = vmatprep.subr.bf16.mxu0 0
    %325 = vmatpush1.bf16.msra.mxu0 %v296
    %326 = vmatprep.subr.bf16.mxu0 0
    %327 = vmatpush1.bf16.msra.mxu0 %v295
    %328 = vmatprep.subr.bf16.mxu0 0
    %329 = vmatpush1.bf16.msra.mxu0 %v294
    %330 = vmatprep.subr.bf16.mxu0 0
    %331 = vmatpush1.bf16.msra.mxu0 %v293
    %332 = vmatprep.subr.bf16.mxu0 0
    %333 = vmatpush1.bf16.msra.mxu0 %v292
    %334 = vmatprep.subr.bf16.mxu0 0
    %335 = vmatpush1.bf16.msra.mxu0 %v291
    %336 = vmatprep.subr.bf16.mxu0 0
    %337 = vmatpush1.bf16.msra.mxu0 %v290
    %338 = vmatprep.subr.bf16.mxu0 0
    %339 = vmatpush2.bf16.msra.mxu0 %v305
    %340 = vmatprep.subr.bf16.mxu0 0
    %341 = vmatpush2.bf16.msra.mxu0 %v304
    %342 = vmatprep.subr.bf16.mxu0 0
    %343 = vmatpush2.bf16.msra.mxu0 %v303
    %344 = vmatprep.subr.bf16.mxu0 0
    %345 = vmatpush2.bf16.msra.mxu0 %v302
    %346 = vmatprep.subr.bf16.mxu0 0
    %347 = vmatpush2.bf16.msra.mxu0 %v301
    %348 = vmatprep.subr.bf16.mxu0 0
    %349 = vmatpush2.bf16.msra.mxu0 %v300
    %350 = vmatprep.subr.bf16.mxu0 0
    %351 = vmatpush2.bf16.msra.mxu0 %v299
    %352 = vmatprep.subr.bf16.mxu0 0
    %353 = vmatpush2.bf16.msra.mxu0 %v298
    %354 = vmatprep.mubr.bf16.mxu0 %v140
    %355 = vmatmul.mubr.bf16.gmra.mxu0 %v139
    %v356 = vpop.f32.mrf.mxu0
    %v357 = vadd.f32 %v221, %v356
    %v358 = vpop.f32.mrf.mxu0
    %v359 = vpop.f32.mrf.mxu0
    %v360 = vpop.f32.mrf.mxu0
    %361 = vdwg.mxu0
    %v362 = vld [vmem:[#allocation10] sm:$0x1]
    %v364 = vlaneseq
    %v365 = vshrl.u32 %v364, 7
    %v366 = vsub.s32 0, %v365
    %v367 = vrot.slane %v362, %v366
    %v369 = vadd.f32 %v357, %v367
    %v370 = vmax.f32 %v369, 0.0
    %v371 = vpack.c.bf16 %v370, %v370
    %v372 = vld [vmem:[%s6] sm:$0xf]
    %v373 = vld [vmem:[%s6 + $0x4] sm:$0xf]
    %v374 = vld [vmem:[%s6 + $0x8] sm:$0xf]
    %v375 = vld [vmem:[%s6 + $0xc] sm:$0xf]
    %v376 = vld [vmem:[%s6 + $0x10] sm:$0xf]
    %v377 = vld [vmem:[%s6 + $0x14] sm:$0xf]
    %v378 = vld [vmem:[%s6 + $0x18] sm:$0xf]
    %v379 = vld [vmem:[%s6 + $0x1c] sm:$0xf]
    %v380 = vld [vmem:[%s6 + $0x20] sm:$0xf]
    %v381 = vld [vmem:[%s6 + $0x24] sm:$0xf]
    %v382 = vld [vmem:[%s6 + $0x28] sm:$0xf]
    %v383 = vld [vmem:[%s6 + $0x2c] sm:$0xf]
    %v384 = vld [vmem:[%s6 + $0x30] sm:$0xf]
    %v385 = vld [vmem:[%s6 + $0x34] sm:$0xf]
    %v386 = vld [vmem:[%s6 + $0x38] sm:$0xf]
    %v387 = vld [vmem:[%s6 + $0x3c] sm:$0xf]
    %v388 = vld [vmem:[#allocation11] sm:$0x1]
    %v390 = vlaneseq
    %v391 = vshrl.u32 %v390, 7
    %v392 = vsub.s32 0, %v391
    %v393 = vrot.slane %v388, %v392
    %v411 = vunpack.c.l.b16 %v372
    %v412 = vunpack.c.l.b16 %v373
    %v413 = vunpack.c.l.b16 %v374
    %v414 = vunpack.c.l.b16 %v375
    %v415 = vunpack.c.l.b16 %v376
    %v416 = vunpack.c.l.b16 %v377
    %v417 = vunpack.c.l.b16 %v378
    %v418 = vunpack.c.l.b16 %v379
    %v419 = vunpack.c.l.b16 %v380
    %v420 = vunpack.c.l.b16 %v381
    %v421 = vunpack.c.l.b16 %v382
    %v422 = vunpack.c.l.b16 %v383
    %v423 = vunpack.c.l.b16 %v384
    %v424 = vunpack.c.l.b16 %v385
    %v425 = vunpack.c.l.b16 %v386
    %v426 = vunpack.c.l.b16 %v387
    %v427 = vpack.c.b16 %v412, %v411
    %v428 = vpack.c.b16 %v414, %v413
    %v429 = vpack.c.b16 %v416, %v415
    %v430 = vpack.c.b16 %v418, %v417
    %v431 = vpack.c.b16 %v420, %v419
    %v432 = vpack.c.b16 %v422, %v421
    %v433 = vpack.c.b16 %v424, %v423
    %v434 = vpack.c.b16 %v426, %v425
    %443 = vmatprep.subr.bf16.mxu0 0
    %444 = vmatpush1.bf16.msra.mxu0 %v434
    %445 = vmatprep.subr.bf16.mxu0 0
    %446 = vmatpush1.bf16.msra.mxu0 %v433
    %447 = vmatprep.subr.bf16.mxu0 0
    %448 = vmatpush1.bf16.msra.mxu0 %v432
    %449 = vmatprep.subr.bf16.mxu0 0
    %450 = vmatpush1.bf16.msra.mxu0 %v431
    %451 = vmatprep.subr.bf16.mxu0 0
    %452 = vmatpush1.bf16.msra.mxu0 %v430
    %453 = vmatprep.subr.bf16.mxu0 0
    %454 = vmatpush1.bf16.msra.mxu0 %v429
    %455 = vmatprep.subr.bf16.mxu0 0
    %456 = vmatpush1.bf16.msra.mxu0 %v428
    %457 = vmatprep.subr.bf16.mxu0 0
    %458 = vmatpush1.bf16.msra.mxu0 %v427
    %459 = vmatprep.subr.bf16.mxu0 0
    %460 = vmatpush2.bf16.msra.mxu0 0
    %461 = vmatprep.subr.bf16.mxu0 0
    %462 = vmatpush2.bf16.msra.mxu0 0
    %463 = vmatprep.subr.bf16.mxu0 0
    %464 = vmatpush2.bf16.msra.mxu0 0
    %465 = vmatprep.subr.bf16.mxu0 0
    %466 = vmatpush2.bf16.msra.mxu0 0
    %467 = vmatprep.subr.bf16.mxu0 0
    %468 = vmatpush2.bf16.msra.mxu0 0
    %469 = vmatprep.subr.bf16.mxu0 0
    %470 = vmatpush2.bf16.msra.mxu0 0
    %471 = vmatprep.subr.bf16.mxu0 0
    %472 = vmatpush2.bf16.msra.mxu0 0
    %473 = vmatprep.subr.bf16.mxu0 0
    %474 = vmatpush2.bf16.msra.mxu0 0
    %475 = vmatprep.mubr.bf16.mxu0 0
    %476 = vmatmul.mubr.bf16.gmra.mxu0 %v371
    %v477 = vpop.f32.mrf.mxu0
    %v478 = vadd.f32 %v393, %v477
    %v479 = vpop.f32.mrf.mxu0
    %v480 = vpop.f32.mrf.mxu0
    %v481 = vpop.f32.mrf.mxu0
    %482 = vdwg.mxu0
    %483 = vmax.xlane.f32.xlu0 %v478
    %v484 = vpop.xlane.xlu0 %483
    %v485 = vsub.f32 %v478, %v484
    %v486 = vmul.f32 %v485, 1.442695
    %v487 = vpow.pop %v486
    %488 = vadd.xlane.f32.xlu0 %v487
    %v489 = vpop.xlane.xlu0 %488
    %v490 = vrcp.pop %v489
    %v491 = vmul.f32 %v487, %v490
    %v492 = vpack.c.bf16 %v491, %v491
    %vm493 = vcmask 257024
    %494 = vst.msk [vmem:[#allocation15] sm:$0xf] %vm493, %v492
    %v495 = vld [vmem:[%s8] sm:$0xf]
    %v496 = vld [vmem:[%s8 + $0x4] sm:$0xf]
    %v497 = vld [vmem:[%s8 + $0x8] sm:$0xf]
    %v498 = vld [vmem:[%s8 + $0xc] sm:$0xf]
    %v499 = vld [vmem:[%s8 + $0x10] sm:$0xf]
    %v500 = vld [vmem:[%s8 + $0x14] sm:$0xf]
    %v501 = vld [vmem:[%s8 + $0x18] sm:$0xf]
    %v502 = vld [vmem:[%s8 + $0x1c] sm:$0xf]
    %v503 = vld [vmem:[%s8 + $0x20] sm:$0xf]
    %v504 = vld [vmem:[%s8 + $0x24] sm:$0xf]
    %v505 = vld [vmem:[%s8 + $0x28] sm:$0xf]
    %v506 = vld [vmem:[%s8 + $0x2c] sm:$0xf]
    %v507 = vld [vmem:[%s8 + $0x30] sm:$0xf]
    %v508 = vld [vmem:[%s8 + $0x34] sm:$0xf]
    %v509 = vld [vmem:[%s8 + $0x38] sm:$0xf]
    %v510 = vld [vmem:[%s8 + $0x3c] sm:$0xf]
    %v527 = vunpack.c.l.b16 %v495
    %v528 = vunpack.c.l.b16 %v496
    %v529 = vunpack.c.l.b16 %v497
    %v530 = vunpack.c.l.b16 %v498
    %v531 = vunpack.c.l.b16 %v499
    %v532 = vunpack.c.l.b16 %v500
    %v533 = vunpack.c.l.b16 %v501
    %v534 = vunpack.c.l.b16 %v502
    %v535 = vunpack.c.l.b16 %v503
    %v536 = vunpack.c.l.b16 %v504
    %v537 = vunpack.c.l.b16 %v505
    %v538 = vunpack.c.l.b16 %v506
    %v539 = vunpack.c.l.b16 %v507
    %v540 = vunpack.c.l.b16 %v508
    %v541 = vunpack.c.l.b16 %v509
    %v542 = vunpack.c.l.b16 %v510
    %v543 = vpack.c.b16 %v528, %v527
    %v544 = vpack.c.b16 %v530, %v529
    %v545 = vpack.c.b16 %v532, %v531
    %v546 = vpack.c.b16 %v534, %v533
    %v547 = vpack.c.b16 %v536, %v535
    %v548 = vpack.c.b16 %v538, %v537
    %v549 = vpack.c.b16 %v540, %v539
    %v550 = vpack.c.b16 %v542, %v541
    %559 = vmatprep.subr.bf16.mxu0 0
    %560 = vmatpush1.bf16.msra.mxu0 %v550
    %561 = vmatprep.subr.bf16.mxu0 0
    %562 = vmatpush1.bf16.msra.mxu0 %v549
    %563 = vmatprep.subr.bf16.mxu0 0
    %564 = vmatpush1.bf16.msra.mxu0 %v548
    %565 = vmatprep.subr.bf16.mxu0 0
    %566 = vmatpush1.bf16.msra.mxu0 %v547
    %567 = vmatprep.subr.bf16.mxu0 0
    %568 = vmatpush1.bf16.msra.mxu0 %v546
    %569 = vmatprep.subr.bf16.mxu0 0
    %570 = vmatpush1.bf16.msra.mxu0 %v545
    %571 = vmatprep.subr.bf16.mxu0 0
    %572 = vmatpush1.bf16.msra.mxu0 %v544
    %573 = vmatprep.subr.bf16.mxu0 0
    %574 = vmatpush1.bf16.msra.mxu0 %v543
    %575 = vmatprep.subr.bf16.mxu0 0
    %576 = vmatpush2.bf16.msra.mxu0 0
    %577 = vmatprep.subr.bf16.mxu0 0
    %578 = vmatpush2.bf16.msra.mxu0 0
    %579 = vmatprep.subr.bf16.mxu0 0
    %580 = vmatpush2.bf16.msra.mxu0 0
    %581 = vmatprep.subr.bf16.mxu0 0
    %582 = vmatpush2.bf16.msra.mxu0 0
    %583 = vmatprep.subr.bf16.mxu0 0
    %584 = vmatpush2.bf16.msra.mxu0 0
    %585 = vmatprep.subr.bf16.mxu0 0
    %586 = vmatpush2.bf16.msra.mxu0 0
    %587 = vmatprep.subr.bf16.mxu0 0
    %588 = vmatpush2.bf16.msra.mxu0 0
    %589 = vmatprep.subr.bf16.mxu0 0
    %590 = vmatpush2.bf16.msra.mxu0 0
    %591 = vmatprep.mubr.bf16.mxu0 0
    %592 = vmatmul.mubr.bf16.gmra.mxu0 %v492
    %v593 = vpop.f32.mrf.mxu0
    %v594 = vadd.f32 0.0, %v593
    %v595 = vpop.f32.mrf.mxu0
    %v596 = vpop.f32.mrf.mxu0
    %v597 = vpop.f32.mrf.mxu0
    %598 = vdwg.mxu0
    %v599 = vpack.c.bf16 %v594, %v594
    %v600 = vld [vmem:[%s9] sm:$0xf]
    %v601 = vld [vmem:[%s9 + $0x4] sm:$0xf]
    %v602 = vld [vmem:[%s9 + $0x8] sm:$0xf]
    %v603 = vld [vmem:[%s9 + $0xc] sm:$0xf]
    %v604 = vld [vmem:[%s9 + $0x10] sm:$0xf]
    %v605 = vld [vmem:[%s9 + $0x14] sm:$0xf]
    %v606 = vld [vmem:[%s9 + $0x18] sm:$0xf]
    %v607 = vld [vmem:[%s9 + $0x1c] sm:$0xf]
    %v608 = vld [vmem:[%s10] sm:$0xf]
    %v610 = vsel %vm178, %v144, 0
    %v613 = vsel %vm182, %v608, 0
    %615 = vmatprep.subr.bf16.mxu0 0
    %616 = vmatpush1.bf16.msra.mxu0 0
    %617 = vmatprep.subr.bf16.mxu0 0
    %618 = vmatpush1.bf16.msra.mxu0 0
    %619 = vmatprep.subr.bf16.mxu0 0
    %620 = vmatpush1.bf16.msra.mxu0 0
    %621 = vmatprep.subr.bf16.mxu0 0
    %622 = vmatpush1.bf16.msra.mxu0 0
    %623 = vmatprep.subr.bf16.mxu0 0
    %624 = vmatpush1.bf16.msra.mxu0 0
    %625 = vmatprep.subr.bf16.mxu0 0
    %626 = vmatpush1.bf16.msra.mxu0 0
    %627 = vmatprep.subr.bf16.mxu0 0
    %628 = vmatpush1.bf16.msra.mxu0 0
    %629 = vmatprep.subr.bf16.mxu0 0
    %630 = vmatpush1.bf16.msra.mxu0 %v613
    %631 = vmatprep.subr.bf16.mxu0 0
    %632 = vmatpush2.bf16.msra.mxu0 0
    %633 = vmatprep.subr.bf16.mxu0 0
    %634 = vmatpush2.bf16.msra.mxu0 0
    %635 = vmatprep.subr.bf16.mxu0 0
    %636 = vmatpush2.bf16.msra.mxu0 0
    %637 = vmatprep.subr.bf16.mxu0 0
    %638 = vmatpush2.bf16.msra.mxu0 0
    %639 = vmatprep.subr.bf16.mxu0 0
    %640 = vmatpush2.bf16.msra.mxu0 0
    %641 = vmatprep.subr.bf16.mxu0 0
    %642 = vmatpush2.bf16.msra.mxu0 0
    %643 = vmatprep.subr.bf16.mxu0 0
    %644 = vmatpush2.bf16.msra.mxu0 0
    %645 = vmatprep.subr.bf16.mxu0 0
    %646 = vmatpush2.bf16.msra.mxu0 0
    %647 = vmatprep.mubr.bf16.mxu0 0
    %648 = vmatmul.mubr.bf16.gmra.mxu0 %v610
    %v649 = vpop.f32.mrf.mxu0
    %v650 = vadd.f32 0.0, %v649
    %v651 = vpop.f32.mrf.mxu0
    %v652 = vpop.f32.mrf.mxu0
    %v653 = vpop.f32.mrf.mxu0
    %654 = vdwg.mxu0
    %v663 = vunpack.c.l.b16 %v600
    %v664 = vunpack.c.l.b16 %v601
    %v665 = vunpack.c.l.b16 %v602
    %v666 = vunpack.c.l.b16 %v603
    %v667 = vunpack.c.l.b16 %v604
    %v668 = vunpack.c.l.b16 %v605
    %v669 = vunpack.c.l.b16 %v606
    %v670 = vunpack.c.l.b16 %v607
    %v671 = vpack.c.b16 %v664, %v663
    %v672 = vpack.c.b16 %v666, %v665
    %v673 = vpack.c.b16 %v668, %v667
    %v674 = vpack.c.b16 %v670, %v669
    %vm679 = vcmask 523264
    %v681 = vsel %vm679, %v599, 0
    %683 = vmatprep.subr.bf16.mxu0 0
    %684 = vmatpush1.bf16.msra.mxu0 0
    %685 = vmatprep.subr.bf16.mxu0 0
    %686 = vmatpush1.bf16.msra.mxu0 0
    %687 = vmatprep.subr.bf16.mxu0 0
    %688 = vmatpush1.bf16.msra.mxu0 0
    %689 = vmatprep.subr.bf16.mxu0 0
    %690 = vmatpush1.bf16.msra.mxu0 0
    %691 = vmatprep.subr.bf16.mxu0 0
    %692 = vmatpush1.bf16.msra.mxu0 %v674
    %693 = vmatprep.subr.bf16.mxu0 0
    %694 = vmatpush1.bf16.msra.mxu0 %v673
    %695 = vmatprep.subr.bf16.mxu0 0
    %696 = vmatpush1.bf16.msra.mxu0 %v672
    %697 = vmatprep.subr.bf16.mxu0 0
    %698 = vmatpush1.bf16.msra.mxu0 %v671
    %699 = vmatprep.subr.bf16.mxu0 0
    %700 = vmatpush2.bf16.msra.mxu0 0
    %701 = vmatprep.subr.bf16.mxu0 0
    %702 = vmatpush2.bf16.msra.mxu0 0
    %703 = vmatprep.subr.bf16.mxu0 0
    %704 = vmatpush2.bf16.msra.mxu0 0
    %705 = vmatprep.subr.bf16.mxu0 0
    %706 = vmatpush2.bf16.msra.mxu0 0
    %707 = vmatprep.subr.bf16.mxu0 0
    %708 = vmatpush2.bf16.msra.mxu0 0
    %709 = vmatprep.subr.bf16.mxu0 0
    %710 = vmatpush2.bf16.msra.mxu0 0
    %711 = vmatprep.subr.bf16.mxu0 0
    %712 = vmatpush2.bf16.msra.mxu0 0
    %713 = vmatprep.subr.bf16.mxu0 0
    %714 = vmatpush2.bf16.msra.mxu0 0
    %715 = vmatprep.mubr.bf16.mxu0 0
    %716 = vmatmul.mubr.bf16.gmra.mxu0 %v681
    %v717 = vpop.f32.mrf.mxu0
    %v718 = vadd.f32 %v650, %v717
    %v719 = vpop.f32.mrf.mxu0
    %v720 = vpop.f32.mrf.mxu0
    %v721 = vpop.f32.mrf.mxu0
    %722 = vdwg.mxu0
    %v723 = vld [vmem:[%s11] sm:$0x1]
    %v725 = vlaneseq
    %v726 = vshrl.u32 %v725, 7
    %v727 = vsub.s32 0, %v726
    %v728 = vrot.slane %v723, %v727
    %v730 = vadd.f32 %v718, %v728
    %v731 = vmax.f32 %v730, 0.0
    %v732 = vpack.c.bf16 %v731, %v731
    %v733 = vld [vmem:[#allocation13] sm:$0xff]
    %v734 = vld [vmem:[#allocation13 + $0x8] sm:$0xff]
    %v735 = vld [vmem:[#allocation13 + $0x10] sm:$0xff]
    %v736 = vld [vmem:[#allocation13 + $0x18] sm:$0xff]
    %v737 = vld [vmem:[#allocation13 + $0x20] sm:$0xff]
    %v738 = vld [vmem:[#allocation13 + $0x28] sm:$0xff]
    %v739 = vld [vmem:[#allocation13 + $0x30] sm:$0xff]
    %v740 = vld [vmem:[#allocation13 + $0x38] sm:$0xff]
    %v741 = vld [vmem:[#allocation13 + $0x40] sm:$0xff]
    %v742 = vld [vmem:[#allocation13 + $0x48] sm:$0xff]
    %v743 = vld [vmem:[#allocation13 + $0x50] sm:$0xff]
    %v744 = vld [vmem:[#allocation13 + $0x58] sm:$0xff]
    %v745 = vld [vmem:[#allocation13 + $0x60] sm:$0xff]
    %v746 = vld [vmem:[#allocation13 + $0x68] sm:$0xff]
    %v747 = vld [vmem:[#allocation13 + $0x70] sm:$0xff]
    %v748 = vld [vmem:[#allocation13 + $0x78] sm:$0xff]
    %v749 = vld [vmem:[%s13] sm:$0x3]
    %v751 = vlaneseq
    %v752 = vshrl.u32 %v751, 7
    %v753 = vsub.s32 0, %v752
    %v754 = vrot.slane %v749, %v753
    %v755 = vlaneseq
    %v756 = vshrl.u32 %v755, 7
    %v757 = vsub.s32 1, %v756
    %v758 = vrot.slane %v749, %v757
    %v777 = vunpack.c.l.b16 %v733
    %v778 = vunpack.c.h.b16 %v733
    %v779 = vunpack.c.l.b16 %v734
    %v780 = vunpack.c.h.b16 %v734
    %v781 = vunpack.c.l.b16 %v735
    %v782 = vunpack.c.h.b16 %v735
    %v783 = vunpack.c.l.b16 %v736
    %v784 = vunpack.c.h.b16 %v736
    %v785 = vunpack.c.l.b16 %v737
    %v786 = vunpack.c.h.b16 %v737
    %v787 = vunpack.c.l.b16 %v738
    %v788 = vunpack.c.h.b16 %v738
    %v789 = vunpack.c.l.b16 %v739
    %v790 = vunpack.c.h.b16 %v739
    %v791 = vunpack.c.l.b16 %v740
    %v792 = vunpack.c.h.b16 %v740
    %v793 = vunpack.c.l.b16 %v741
    %v794 = vunpack.c.h.b16 %v741
    %v795 = vunpack.c.l.b16 %v742
    %v796 = vunpack.c.h.b16 %v742
    %v797 = vunpack.c.l.b16 %v743
    %v798 = vunpack.c.h.b16 %v743
    %v799 = vunpack.c.l.b16 %v744
    %v800 = vunpack.c.h.b16 %v744
    %v801 = vunpack.c.l.b16 %v745
    %v802 = vunpack.c.h.b16 %v745
    %v803 = vunpack.c.l.b16 %v746
    %v804 = vunpack.c.h.b16 %v746
    %v805 = vunpack.c.l.b16 %v747
    %v806 = vunpack.c.h.b16 %v747
    %v807 = vunpack.c.l.b16 %v748
    %v808 = vunpack.c.h.b16 %v748
    %v809 = vpack.c.b16 %v779, %v777
    %v810 = vpack.c.b16 %v780, %v778
    %v811 = vpack.c.b16 %v783, %v781
    %v812 = vpack.c.b16 %v784, %v782
    %v813 = vpack.c.b16 %v787, %v785
    %v814 = vpack.c.b16 %v788, %v786
    %v815 = vpack.c.b16 %v791, %v789
    %v816 = vpack.c.b16 %v792, %v790
    %v817 = vpack.c.b16 %v795, %v793
    %v818 = vpack.c.b16 %v796, %v794
    %v819 = vpack.c.b16 %v799, %v797
    %v820 = vpack.c.b16 %v800, %v798
    %v821 = vpack.c.b16 %v803, %v801
    %v822 = vpack.c.b16 %v804, %v802
    %v823 = vpack.c.b16 %v807, %v805
    %v824 = vpack.c.b16 %v808, %v806
    %841 = vmatprep.subr.bf16.mxu0 %v824
    %842 = vmatpush1.bf16.msra.mxu0 %v823
    %843 = vmatprep.subr.bf16.mxu0 %v822
    %844 = vmatpush1.bf16.msra.mxu0 %v821
    %845 = vmatprep.subr.bf16.mxu0 %v820
    %846 = vmatpush1.bf16.msra.mxu0 %v819
    %847 = vmatprep.subr.bf16.mxu0 %v818
    %848 = vmatpush1.bf16.msra.mxu0 %v817
    %849 = vmatprep.subr.bf16.mxu0 %v816
    %850 = vmatpush1.bf16.msra.mxu0 %v815
    %851 = vmatprep.subr.bf16.mxu0 %v814
    %852 = vmatpush1.bf16.msra.mxu0 %v813
    %853 = vmatprep.subr.bf16.mxu0 %v812
    %854 = vmatpush1.bf16.msra.mxu0 %v811
    %855 = vmatprep.subr.bf16.mxu0 %v810
    %856 = vmatpush1.bf16.msra.mxu0 %v809
    %857 = vmatprep.subr.bf16.mxu0 0
    %858 = vmatpush2.bf16.msra.mxu0 0
    %859 = vmatprep.subr.bf16.mxu0 0
    %860 = vmatpush2.bf16.msra.mxu0 0
    %861 = vmatprep.subr.bf16.mxu0 0
    %862 = vmatpush2.bf16.msra.mxu0 0
    %863 = vmatprep.subr.bf16.mxu0 0
    %864 = vmatpush2.bf16.msra.mxu0 0
    %865 = vmatprep.subr.bf16.mxu0 0
    %866 = vmatpush2.bf16.msra.mxu0 0
    %867 = vmatprep.subr.bf16.mxu0 0
    %868 = vmatpush2.bf16.msra.mxu0 0
    %869 = vmatprep.subr.bf16.mxu0 0
    %870 = vmatpush2.bf16.msra.mxu0 0
    %871 = vmatprep.subr.bf16.mxu0 0
    %872 = vmatpush2.bf16.msra.mxu0 0
    %873 = vmatprep.mubr.bf16.mxu0 0
    %874 = vmatmul.mubr.bf16.gmra.mxu0 %v732
    %v875 = vpop.f32.mrf.mxu0
    %v876 = vadd.f32 %v754, %v875
    %v877 = vpop.f32.mrf.mxu0
    %v878 = vadd.f32 %v758, %v877
    %v879 = vpop.f32.mrf.mxu0
    %v880 = vpop.f32.mrf.mxu0
    %881 = vdwg.mxu0
    %v882 = vxor.u32 %v876, 2147483648
    %v883 = vxor.u32 %v878, 2147483648
    %v884 = vmul.f32 %v882, 1.442695
    %v885 = vpow.pop %v884
    %v886 = vmul.f32 %v883, 1.442695
    %v887 = vpow.pop %v886
    %v888 = vadd.f32 %v885, 1.0
    %v889 = vadd.f32 %v887, 1.0
    %v890 = vrcp.pop %v888
    %v891 = vmul.f32 1.0, %v890
    %v892 = vrcp.pop %v889
    %v893 = vmul.f32 1.0, %v892
    %v894 = vpack.c.bf16 %v891, %v891
    %v895 = vpack.c.bf16 %v893, %v893
    %v898 = vunpack.c.l.b16 %v894
    %v899 = vunpack.c.l.b16 %v895
    %v900 = vpack.c.b16 %v899, %v898
    %902 = vst [vmem:[#allocation14] sm:$0xff] %v900
    // Predicated region
    $region86: #{tpu_custom_call.1} parent=1 // pred_check
      _
    $region87: #{tpu_custom_call.1} parent=1 // pred_check_branch
      %904 = sbr.rel (0) target = $region89
    $region88: #{tpu_custom_call.1} parent=1 // pred_region
      %s906 = ssub.s32 128, 128
      %907 = vsyncadd [#allocation4], %s906
      %s909 = sshll.u32 [#allocation14], 4
      %s910 = int_to_ptr.vmem [resolvable:$true] %s909
      %912 = dma.vmem_to_hbm [thread:$0]  %s910, 128, %s14, [#allocation4]
    $region89: #{tpu_custom_call.1} parent=1 // pred_fallthru
      _
    // Predicated region
    $region90: #{tpu_custom_call.1} parent=1 // pred_check
      _
    $region91: #{tpu_custom_call.1} parent=1 // pred_check_branch
      %914 = sbr.rel (0) target = $region93
    $region92: #{tpu_custom_call.1} parent=1 // pred_region
      %s916 = ssub.s32 64, 64
      %917 = vsyncadd [#allocation16], %s916
      %s919 = sshll.u32 [#allocation15], 4
      %s920 = int_to_ptr.vmem [resolvable:$true] %s919
      %922 = dma.vmem_to_hbm [thread:$0]  %s920, 64, %s15, [#allocation16]
    $region93: #{tpu_custom_call.1} parent=1 // pred_fallthru
      _
    // Predicated region
    $region94: #{tpu_custom_call.1} parent=1 // pred_check
      _
    $region95: #{tpu_custom_call.1} parent=1 // pred_check_branch
      %924 = sbr.rel (0) target = $region97
    $region96: #{tpu_custom_call.1} parent=1 // pred_region
      %925 = dma.done [#allocation4], 128
    $region97: #{tpu_custom_call.1} parent=1 // pred_fallthru
      _
    // Predicated region
    $region98: #{tpu_custom_call.1} parent=1 // pred_check
      _
    $region99: #{tpu_custom_call.1} parent=1 // pred_check_branch
      %927 = sbr.rel (0) target = $region101
    $region100: #{tpu_custom_call.1} parent=1 // pred_region
      %928 = dma.done [#allocation16], 64
    $region101: #{tpu_custom_call.1} parent=1 // pred_fallthru
      _
    %929 = vsyncpa [#allocation3], 1
    %930 = vsyncpa [#allocation6], 1
    %931 = vsyncpa [#allocation9], 1
    %932 = vsyncpa [#allocation12], 1
    %933 = vsyncpa [#allocation4], 1
    %934 = vsyncpa [#allocation16], 1

// kernel: tpu_custom_call.1
$region0: #{tpu_custom_call.1}
  #allocation0 [shape = 'u32[]', space=smem, size = 0x4, offset = 0x4, fixed_abs, tag = 'smem constant byte address 0x4 - core index']
  #allocation1 [shape = 'u32[144,128]{1,0:T(1,128)}', space=vmem, size = 0x12000, scoped, tag = 'internal scratch']
  %s0 = inlined_call_operand.hbm [shape: f32[8,256], index: 0, kind: input, shape index: {}]
  %s1 = inlined_call_operand.vmem [shape: f32[8,8], index: 1, kind: input, shape index: {}]
  %s2 = inlined_call_operand.hbm [shape: f32[8,8], index: 2, kind: input, shape index: {}]
  %s3 = inlined_call_operand.hbm [shape: bf16[256,128], index: 3, kind: input, shape index: {}]
  %s4 = inlined_call_operand.hbm [shape: bf16[8,128], index: 4, kind: input, shape index: {}]
  %s5 = inlined_call_operand.hbm [shape: f32[1,128], index: 5, kind: input, shape index: {}]
  %s6 = inlined_call_operand.vmem [shape: bf16[128,128], index: 6, kind: input, shape index: {}]
  %s7 = inlined_call_operand.hbm [shape: f32[1,128], index: 7, kind: input, shape index: {}]
  %s8 = inlined_call_operand.vmem [shape: bf16[128,64], index: 8, kind: input, shape index: {}]
  %s9 = inlined_call_operand.vmem [shape: bf16[64,128], index: 9, kind: input, shape index: {}]
  %s10 = inlined_call_operand.vmem [shape: bf16[8,128], index: 10, kind: input, shape index: {}]
  %s11 = inlined_call_operand.vmem [shape: f32[1,128], index: 11, kind: input, shape index: {}]
  %s12 = inlined_call_operand.hbm [shape: bf16[128,256], index: 12, kind: input, shape index: {}]
  %s13 = inlined_call_operand.vmem [shape: f32[1,256], index: 13, kind: input, shape index: {}]
  %s14 = inlined_call_operand.hbm [shape: bf16[8,256], index: 14, kind: output, shape index: {0}]
  %s15 = inlined_call_operand.hbm [shape: bf16[8,32], index: 15, kind: output, shape index: {1}]
  %16 = xla_tuple %s14, %s15
  %s17 = sld [smem:[#allocation0]]
  $region102: #{tpu_custom_call.1} parent=0
    _
  %s19 = ssub.s32 1, %s17
  %s20 = scalar_select 0, %s19, %s17
  $region1: #{tpu_custom_call.1} parent=0
    #allocation2 [shape = 'u8[8192]{0}', space=vmem, size = 0x2000, scoped, tag = 'input window, operand 0, single buffered']
    #allocation3 [shape = 's32[1]{0}', space=sflag, size = 0x4, scoped, tag = 'scoped memory for tpu_custom_call.1']
    #allocation4 [shape = 's32[1]{0}', space=sflag, size = 0x4, scoped, tag = 'scoped memory for tpu_custom_call.1']
    #allocation5 [shape = 'u8[4096]{0}', space=vmem, size = 0x1000, scoped, tag = 'input window, operand 2, single buffered']
    #allocation6 [shape = 's32[1]{0}', space=sflag, size = 0x4, scoped, tag = 'scoped memory for tpu_custom_call.1']
    #allocation7 [shape = 'u8[65536]{0}', space=vmem, size = 0x10000, scoped, tag = 'input window, operand 3, single buffered']
    #allocation8 [shape = 'u8[2048]{0}', space=vmem, size = 0x800, scoped, tag = 'input window, operand 4, single buffered']
    #allocation9 [shape = 's32[1]{0}', space=sflag, size = 0x4, scoped, tag = 'scoped memory for tpu_custom_call.1']
    #allocation10 [shape = 'u8[512]{0}', space=vmem, size = 0x400, scoped, tag = 'input window, operand 5, single buffered']
    #allocation11 [shape = 'u8[512]{0}', space=vmem, size = 0x400, scoped, tag = 'input window, operand 7, single buffered']
    #allocation12 [shape = 's32[1]{0}', space=sflag, size = 0x4, scoped, tag = 'scoped memory for tpu_custom_call.1']
    #allocation13 [shape = 'u8[65536]{0}', space=vmem, size = 0x10000, scoped, tag = 'input window, operand 12, single buffered']
    #allocation14 [shape = 'u8[4096]{0}', space=vmem, size = 0x1000, scoped, tag = 'output window, operand 0, single buffered']
    #allocation15 [shape = 'u8[2048]{0}', space=vmem, size = 0x800, scoped, tag = 'output window, operand 1, single buffered']
    #allocation16 [shape = 's32[1]{0}', space=sflag, size = 0x4, scoped, tag = 'scoped memory for tpu_custom_call.1']
    %21 = vsyncpa [#allocation3], 0
    %22 = vsyncpa [#allocation6], 0
    %23 = vsyncpa [#allocation9], 0
    %24 = vsyncpa [#allocation12], 0
    %25 = vsyncpa [#allocation4], 0
    %26 = vsyncpa [#allocation16], 0
    // Predicated region
    $region2: #{tpu_custom_call.1} parent=1 // pred_check
      _
    $region3: #{tpu_custom_call.1} parent=1 // pred_check_branch
      %28 = sbr.rel (0) target = $region5
    $region4: #{tpu_custom_call.1} parent=1 // pred_region
      %s30 = ssub.s32 256, 256
      %31 = vsyncadd [#allocation3], %s30
      %s33 = sshll.u32 [#allocation2], 4
      %s34 = int_to_ptr.vmem [resolvable:$true] %s33
      %36 = dma.hbm_to_vmem [thread:$0]  %s0, 256, %s34, [#allocation3]
    $region5: #{tpu_custom_call.1} parent=1 // pred_fallthru
      _
    // Predicated region
    $region6: #{tpu_custom_call.1} parent=1 // pred_check
      _
    $region7: #{tpu_custom_call.1} parent=1 // pred_check_branch
      %38 = sbr.rel (0) target = $region9
    $region8: #{tpu_custom_call.1} parent=1 // pred_region
      _
    $region9: #{tpu_custom_call.1} parent=1 // pred_fallthru
      _
    // Predicated region
    $region10: #{tpu_custom_call.1} parent=1 // pred_check
      _
    $region11: #{tpu_custom_call.1} parent=1 // pred_check_branch
      %40 = sbr.rel (0) target = $region13
    $region12: #{tpu_custom_call.1} parent=1 // pred_region
      %s42 = ssub.s32 128, 128
      %43 = vsyncadd [#allocation6], %s42
      %s45 = sshll.u32 [#allocation5], 4
      %s46 = int_to_ptr.vmem [resolvable:$true] %s45
      %48 = dma.hbm_to_vmem [thread:$0]  %s2, 128, %s46, [#allocation6]
    $region13: #{tpu_custom_call.1} parent=1 // pred_fallthru
      _
    // Predicated region
    $region14: #{tpu_custom_call.1} parent=1 // pred_check
      _
    $region15: #{tpu_custom_call.1} parent=1 // pred_check_branch
      %50 = sbr.rel (0) target = $region17
    $region16: #{tpu_custom_call.1} parent=1 // pred_region
      %s52 = ssub.s32 2048, 2048
      %53 = vsyncadd [#allocation6], %s52
      %s54 = sshll.u32 [#allocation7], 4
      %s55 = int_to_ptr.vmem [resolvable:$true] %s54
      %60 = dma.hbm_to_vmem [thread:$0]  %s3, 2048, %s55, [#allocation6], 64, 64, 4
    $region17: #{tpu_custom_call.1} parent=1 // pred_fallthru
      _
    // Predicated region
    $region18: #{tpu_custom_call.1} parent=1 // pred_check
      _
    $region19: #{tpu_custom_call.1} parent=1 // pred_check_branch
      %62 = sbr.rel (0) target = $region21
    $region20: #{tpu_custom_call.1} parent=1 // pred_region
      %s64 = ssub.s32 64, 64
      %65 = vsyncadd [#allocation9], %s64
      %s67 = sshll.u32 [#allocation8], 4
      %s68 = int_to_ptr.vmem [resolvable:$true] %s67
      %70 = dma.hbm_to_vmem [thread:$0]  %s4, 64, %s68, [#allocation9]
    $region21: #{tpu_custom_call.1} parent=1 // pred_fallthru
      _
    // Predicated region
    $region22: #{tpu_custom_call.1} parent=1 // pred_check
      _
    $region23: #{tpu_custom_call.1} parent=1 // pred_check_branch
      %72 = sbr.rel (0) target = $region25
    $region24: #{tpu_custom_call.1} parent=1 // pred_region
      %s74 = ssub.s32 16, 16
      %75 = vsyncadd [#allocation9], %s74
      %s77 = sshll.u32 [#allocation10], 4
      %s78 = int_to_ptr.vmem [resolvable:$true] %s77
      %80 = dma.hbm_to_vmem [thread:$0]  %s5, 16, %s78, [#allocation9]
    $region25: #{tpu_custom_call.1} parent=1 // pred_fallthru
      _
    // Predicated region
    $region26: #{tpu_custom_call.1} parent=1 // pred_check
      _
    $region27: #{tpu_custom_call.1} parent=1 // pred_check_branch
      %82 = sbr.rel (0) target = $region29
    $region28: #{tpu_custom_call.1} parent=1 // pred_region
      _
    $region29: #{tpu_custom_call.1} parent=1 // pred_fallthru
      _
    // Predicated region
    $region30: #{tpu_custom_call.1} parent=1 // pred_check
      _
    $region31: #{tpu_custom_call.1} parent=1 // pred_check_branch
      %84 = sbr.rel (0) target = $region33
    $region32: #{tpu_custom_call.1} parent=1 // pred_region
      %s86 = ssub.s32 16, 16
      %87 = vsyncadd [#allocation12], %s86
      %s89 = sshll.u32 [#allocation11], 4
      %s90 = int_to_ptr.vmem [resolvable:$true] %s89
      %92 = dma.hbm_to_vmem [thread:$0]  %s7, 16, %s90, [#allocation12]
    $region33: #{tpu_custom_call.1} parent=1 // pred_fallthru
      _
    // Predicated region
    $region34: #{tpu_custom_call.1} parent=1 // pred_check
      _
    $region35: #{tpu_custom_call.1} parent=1 // pred_check_branch
      %94 = sbr.rel (0) target = $region37
    $region36: #{tpu_custom_call.1} parent=1 // pred_region
      _
    $region37: #{tpu_custom_call.1} parent=1 // pred_fallthru
      _
    // Predicated region
    $region38: #{tpu_custom_call.1} parent=1 // pred_check
      _
    $region39: #{tpu_custom_call.1} parent=1 // pred_check_branch
      %96 = sbr.rel (0) target = $region41
    $region40: #{tpu_custom_call.1} parent=1 // pred_region
      _
    $region41: #{tpu_custom_call.1} parent=1 // pred_fallthru
      _
    // Predicated region
    $region42: #{tpu_custom_call.1} parent=1 // pred_check
      _
    $region43: #{tpu_custom_call.1} parent=1 // pred_check_branch
      %98 = sbr.rel (0) target = $region45
    $region44: #{tpu_custom_call.1} parent=1 // pred_region
      _
    $region45: #{tpu_custom_call.1} parent=1 // pred_fallthru
      _
    // Predicated region
    $region46: #{tpu_custom_call.1} parent=1 // pred_check
      _
    $region47: #{tpu_custom_call.1} parent=1 // pred_check_branch
      %100 = sbr.rel (0) target = $region49
    $region48: #{tpu_custom_call.1} parent=1 // pred_region
      _
    $region49: #{tpu_custom_call.1} parent=1 // pred_fallthru
      _
    // Predicated region
    $region50: #{tpu_custom_call.1} parent=1 // pred_check
      _
    $region51: #{tpu_custom_call.1} parent=1 // pred_check_branch
      %102 = sbr.rel (0) target = $region53
    $region52: #{tpu_custom_call.1} parent=1 // pred_region
      %s104 = ssub.s32 2048, 2048
      %105 = vsyncadd [#allocation12], %s104
      %s106 = sshll.u32 [#allocation13], 4
      %s107 = int_to_ptr.vmem [resolvable:$true] %s106
      %112 = dma.hbm_to_vmem [thread:$0]  %s12, 2048, %s107, [#allocation12], 128, 128, 8
    $region53: #{tpu_custom_call.1} parent=1 // pred_fallthru
      _
    // Predicated region
    $region54: #{tpu_custom_call.1} parent=1 // pred_check
      _
    $region55: #{tpu_custom_call.1} parent=1 // pred_check_branch
      %114 = sbr.rel (0) target = $region57
    $region56: #{tpu_custom_call.1} parent=1 // pred_region
      _
    $region57: #{tpu_custom_call.1} parent=1 // pred_fallthru
      _
    // Predicated region
    $region58: #{tpu_custom_call.1} parent=1 // pred_check
      _
    $region59: #{tpu_custom_call.1} parent=1 // pred_check_branch
      %116 = sbr.rel (0) target = $region61
    $region60: #{tpu_custom_call.1} parent=1 // pred_region
      %117 = dma.done [#allocation3], 256
    $region61: #{tpu_custom_call.1} parent=1 // pred_fallthru
      _
    // Predicated region
    $region62: #{tpu_custom_call.1} parent=1 // pred_check
      _
    $region63: #{tpu_custom_call.1} parent=1 // pred_check_branch
      %119 = sbr.rel (0) target = $region65
    $region64: #{tpu_custom_call.1} parent=1 // pred_region
      %120 = dma.done [#allocation6], 128
    $region65: #{tpu_custom_call.1} parent=1 // pred_fallthru
      _
    // Predicated region
    $region66: #{tpu_custom_call.1} parent=1 // pred_check
      _
    $region67: #{tpu_custom_call.1} parent=1 // pred_check_branch
      %122 = sbr.rel (0) target = $region69
    $region68: #{tpu_custom_call.1} parent=1 // pred_region
      %123 = dma.done [#allocation6], 2048
    $region69: #{tpu_custom_call.1} parent=1 // pred_fallthru
      _
    // Predicated region
    $region70: #{tpu_custom_call.1} parent=1 // pred_check
      _
    $region71: #{tpu_custom_call.1} parent=1 // pred_check_branch
      %125 = sbr.rel (0) target = $region73
    $region72: #{tpu_custom_call.1} parent=1 // pred_region
      %126 = dma.done [#allocation9], 64
    $region73: #{tpu_custom_call.1} parent=1 // pred_fallthru
      _
    // Predicated region
    $region74: #{tpu_custom_call.1} parent=1 // pred_check
      _
    $region75: #{tpu_custom_call.1} parent=1 // pred_check_branch
      %128 = sbr.rel (0) target = $region77
    $region76: #{tpu_custom_call.1} parent=1 // pred_region
      %129 = dma.done [#allocation9], 16
    $region77: #{tpu_custom_call.1} parent=1 // pred_fallthru
      _
    // Predicated region
    $region78: #{tpu_custom_call.1} parent=1 // pred_check
      _
    $region79: #{tpu_custom_call.1} parent=1 // pred_check_branch
      %131 = sbr.rel (0) target = $region81
    $region80: #{tpu_custom_call.1} parent=1 // pred_region
      %132 = dma.done [#allocation12], 16
    $region81: #{tpu_custom_call.1} parent=1 // pred_fallthru
      _
    // Predicated region
    $region82: #{tpu_custom_call.1} parent=1 // pred_check
      _
    $region83: #{tpu_custom_call.1} parent=1 // pred_check_branch
      %134 = sbr.rel (0) target = $region85
    $region84: #{tpu_custom_call.1} parent=1 // pred_region
      %135 = dma.done [#allocation12], 2048
    $region85: #{tpu_custom_call.1} parent=1 // pred_fallthru
      _
    %v137 = vld [vmem:[#allocation2] sm:$0xff]
    %v138 = vld [vmem:[#allocation2 + $0x8] sm:$0xff]
    %v139 = vpack.c.bf16 %v137, %v137
    %v140 = vpack.c.bf16 %v138, %v138
    %v141 = vld [vmem:[%s1] sm:$0xff]
    %v142 = vpack.c.bf16 %v141, %v141
    %v143 = vld [vmem:[#allocation5] sm:$0xff]
    %v144 = vpack.c.bf16 %v143, %v143
    %v145 = vld [vmem:[#allocation7] sm:$0xf]
    %v146 = vld [vmem:[#allocation7 + $0x4] sm:$0xf]
    %v147 = vld [vmem:[#allocation7 + $0x8] sm:$0xf]
    %v148 = vld [vmem:[#allocation7 + $0xc] sm:$0xf]
    %v149 = vld [vmem:[#allocation7 + $0x10] sm:$0xf]
    %v150 = vld [vmem:[#allocation7 + $0x14] sm:$0xf]
    %v151 = vld [vmem:[#allocation7 + $0x18] sm:$0xf]
    %v152 = vld [vmem:[#allocation7 + $0x1c] sm:$0xf]
    %v153 = vld [vmem:[#allocation7 + $0x20] sm:$0xf]
    %v154 = vld [vmem:[#allocation7 + $0x24] sm:$0xf]
    %v155 = vld [vmem:[#allocation7 + $0x28] sm:$0xf]
    %v156 = vld [vmem:[#allocation7 + $0x2c] sm:$0xf]
    %v157 = vld [vmem:[#allocation7 + $0x30] sm:$0xf]
    %v158 = vld [vmem:[#allocation7 + $0x34] sm:$0xf]
    %v159 = vld [vmem:[#allocation7 + $0x38] sm:$0xf]
    %v160 = vld [vmem:[#allocation7 + $0x3c] sm:$0xf]
    %v161 = vld [vmem:[#allocation7 + $0x40] sm:$0xf]
    %v162 = vld [vmem:[#allocation7 + $0x44] sm:$0xf]
    %v163 = vld [vmem:[#allocation7 + $0x48] sm:$0xf]
    %v164 = vld [vmem:[#allocation7 + $0x4c] sm:$0xf]
    %v165 = vld [vmem:[#allocation7 + $0x50] sm:$0xf]
    %v166 = vld [vmem:[#allocation7 + $0x54] sm:$0xf]
    %v167 = vld [vmem:[#allocation7 + $0x58] sm:$0xf]
    %v168 = vld [vmem:[#allocation7 + $0x5c] sm:$0xf]
    %v169 = vld [vmem:[#allocation7 + $0x60] sm:$0xf]
    %v170 = vld [vmem:[#allocation7 + $0x64] sm:$0xf]
    %v171 = vld [vmem:[#allocation7 + $0x68] sm:$0xf]
    %v172 = vld [vmem:[#allocation7 + $0x6c] sm:$0xf]
    %v173 = vld [vmem:[#allocation7 + $0x70] sm:$0xf]
    %v174 = vld [vmem:[#allocation7 + $0x74] sm:$0xf]
    %v175 = vld [vmem:[#allocation7 + $0x78] sm:$0xf]
    %v176 = vld [vmem:[#allocation7 + $0x7c] sm:$0xf]
    %v177 = vld [vmem:[#allocation8] sm:$0xf]
    %vm178 = vcmask 64512
    %v180 = vsel %vm178, %v142, 0
    %vm182 = vcmask 1043456
    %v184 = vsel %vm182, %v177, 0
    %186 = vmatprep.subr.bf16.mxu0 0
    %187 = vmatpush1.bf16.msra.mxu0 0
    %188 = vmatprep.subr.bf16.mxu0 0
    %189 = vmatpush1.bf16.msra.mxu0 0
    %190 = vmatprep.subr.bf16.mxu0 0
    %191 = vmatpush1.bf16.msra.mxu0 0
    %192 = vmatprep.subr.bf16.mxu0 0
    %193 = vmatpush1.bf16.msra.mxu0 0
    %194 = vmatprep.subr.bf16.mxu0 0
    %195 = vmatpush1.bf16.msra.mxu0 0
    %196 = vmatprep.subr.bf16.mxu0 0
    %197 = vmatpush1.bf16.msra.mxu0 0
    %198 = vmatprep.subr.bf16.mxu0 0
    %199 = vmatpush1.bf16.msra.mxu0 0
    %200 = vmatprep.subr.bf16.mxu0 0
    %201 = vmatpush1.bf16.msra.mxu0 %v184
    %202 = vmatprep.subr.bf16.mxu0 0
    %203 = vmatpush2.bf16.msra.mxu0 0
    %204 = vmatprep.subr.bf16.mxu0 0
    %205 = vmatpush2.bf16.msra.mxu0 0
    %206 = vmatprep.subr.bf16.mxu0 0
    %207 = vmatpush2.bf16.msra.mxu0 0
    %208 = vmatprep.subr.bf16.mxu0 0
    %209 = vmatpush2.bf16.msra.mxu0 0
    %210 = vmatprep.subr.bf16.mxu0 0
    %211 = vmatpush2.bf16.msra.mxu0 0
    %212 = vmatprep.subr.bf16.mxu0 0
    %213 = vmatpush2.bf16.msra.mxu0 0
    %214 = vmatprep.subr.bf16.mxu0 0
    %215 = vmatpush2.bf16.msra.mxu0 0
    %216 = vmatprep.subr.bf16.mxu0 0
    %217 = vmatpush2.bf16.msra.mxu0 0
    %218 = vmatprep.mubr.bf16.mxu0 0
    %219 = vmatmul.mubr.bf16.gmra.mxu0 %v180
    %v220 = vpop.f32.mrf.mxu0
    %v221 = vadd.f32 0.0, %v220
    %v222 = vpop.f32.mrf.mxu0
    %v223 = vpop.f32.mrf.mxu0
    %v224 = vpop.f32.mrf.mxu0
    %225 = vdwg.mxu0
    %v258 = vunpack.c.l.b16 %v145
    %v259 = vunpack.c.l.b16 %v146
    %v260 = vunpack.c.l.b16 %v147
    %v261 = vunpack.c.l.b16 %v148
    %v262 = vunpack.c.l.b16 %v149
    %v263 = vunpack.c.l.b16 %v150
    %v264 = vunpack.c.l.b16 %v151
    %v265 = vunpack.c.l.b16 %v152
    %v266 = vunpack.c.l.b16 %v153
    %v267 = vunpack.c.l.b16 %v154
    %v268 = vunpack.c.l.b16 %v155
    %v269 = vunpack.c.l.b16 %v156
    %v270 = vunpack.c.l.b16 %v157
    %v271 = vunpack.c.l.b16 %v158
    %v272 = vunpack.c.l.b16 %v159
    %v273 = vunpack.c.l.b16 %v160
    %v274 = vunpack.c.l.b16 %v161
    %v275 = vunpack.c.l.b16 %v162
    %v276 = vunpack.c.l.b16 %v163
    %v277 = vunpack.c.l.b16 %v164
    %v278 = vunpack.c.l.b16 %v165
    %v279 = vunpack.c.l.b16 %v166
    %v280 = vunpack.c.l.b16 %v167
    %v281 = vunpack.c.l.b16 %v168
    %v282 = vunpack.c.l.b16 %v169
    %v283 = vunpack.c.l.b16 %v170
    %v284 = vunpack.c.l.b16 %v171
    %v285 = vunpack.c.l.b16 %v172
    %v286 = vunpack.c.l.b16 %v173
    %v287 = vunpack.c.l.b16 %v174
    %v288 = vunpack.c.l.b16 %v175
    %v289 = vunpack.c.l.b16 %v176
    %v290 = vpack.c.b16 %v259, %v258
    %v291 = vpack.c.b16 %v261, %v260
    %v292 = vpack.c.b16 %v263, %v262
    %v293 = vpack.c.b16 %v265, %v264
    %v294 = vpack.c.b16 %v267, %v266
    %v295 = vpack.c.b16 %v269, %v268
    %v296 = vpack.c.b16 %v271, %v270
    %v297 = vpack.c.b16 %v273, %v272
    %v298 = vpack.c.b16 %v275, %v274
    %v299 = vpack.c.b16 %v277, %v276
    %v300 = vpack.c.b16 %v279, %v278
    %v301 = vpack.c.b16 %v281, %v280
    %v302 = vpack.c.b16 %v283, %v282
    %v303 = vpack.c.b16 %v285, %v284
    %v304 = vpack.c.b16 %v287, %v286
    %v305 = vpack.c.b16 %v289, %v288
    %322 = vmatprep.subr.bf16.mxu0 0
    %323 = vmatpush1.bf16.msra.mxu0 %v297
    %324 = vmatprep.subr.bf16.mxu0 0
    %325 = vmatpush1.bf16.msra.mxu0 %v296
    %326 = vmatprep.subr.bf16.mxu0 0
    %327 = vmatpush1.bf16.msra.mxu0 %v295
    %328 = vmatprep.subr.bf16.mxu0 0
    %329 = vmatpush1.bf16.msra.mxu0 %v294
    %330 = vmatprep.subr.bf16.mxu0 0
    %331 = vmatpush1.bf16.msra.mxu0 %v293
    %332 = vmatprep.subr.bf16.mxu0 0
    %333 = vmatpush1.bf16.msra.mxu0 %v292
    %334 = vmatprep.subr.bf16.mxu0 0
    %335 = vmatpush1.bf16.msra.mxu0 %v291
    %336 = vmatprep.subr.bf16.mxu0 0
    %337 = vmatpush1.bf16.msra.mxu0 %v290
    %338 = vmatprep.subr.bf16.mxu0 0
    %339 = vmatpush2.bf16.msra.mxu0 %v305
    %340 = vmatprep.subr.bf16.mxu0 0
    %341 = vmatpush2.bf16.msra.mxu0 %v304
    %342 = vmatprep.subr.bf16.mxu0 0
    %343 = vmatpush2.bf16.msra.mxu0 %v303
    %344 = vmatprep.subr.bf16.mxu0 0
    %345 = vmatpush2.bf16.msra.mxu0 %v302
    %346 = vmatprep.subr.bf16.mxu0 0
    %347 = vmatpush2.bf16.msra.mxu0 %v301
    %348 = vmatprep.subr.bf16.mxu0 0
    %349 = vmatpush2.bf16.msra.mxu0 %v300
    %350 = vmatprep.subr.bf16.mxu0 0
    %351 = vmatpush2.bf16.msra.mxu0 %v299
    %352 = vmatprep.subr.bf16.mxu0 0
    %353 = vmatpush2.bf16.msra.mxu0 %v298
    %354 = vmatprep.mubr.bf16.mxu0 %v140
    %355 = vmatmul.mubr.bf16.gmra.mxu0 %v139
    %v356 = vpop.f32.mrf.mxu0
    %v357 = vadd.f32 %v221, %v356
    %v358 = vpop.f32.mrf.mxu0
    %v359 = vpop.f32.mrf.mxu0
    %v360 = vpop.f32.mrf.mxu0
    %361 = vdwg.mxu0
    %v362 = vld [vmem:[#allocation10] sm:$0x1]
    %v364 = vlaneseq
    %v365 = vshrl.u32 %v364, 7
    %v366 = vsub.s32 0, %v365
    %v367 = vrot.slane %v362, %v366
    %v369 = vadd.f32 %v357, %v367
    %v370 = vmax.f32 %v369, 0.0
    %v371 = vpack.c.bf16 %v370, %v370
    %v372 = vld [vmem:[%s6] sm:$0xf]
    %v373 = vld [vmem:[%s6 + $0x4] sm:$0xf]
    %v374 = vld [vmem:[%s6 + $0x8] sm:$0xf]
    %v375 = vld [vmem:[%s6 + $0xc] sm:$0xf]
    %v376 = vld [vmem:[%s6 + $0x10] sm:$0xf]
    %v377 = vld [vmem:[%s6 + $0x14] sm:$0xf]
    %v378 = vld [vmem:[%s6 + $0x18] sm:$0xf]
    %v379 = vld [vmem:[%s6 + $0x1c] sm:$0xf]
    %v380 = vld [vmem:[%s6 + $0x20] sm:$0xf]
    %v381 = vld [vmem:[%s6 + $0x24] sm:$0xf]
    %v382 = vld [vmem:[%s6 + $0x28] sm:$0xf]
    %v383 = vld [vmem:[%s6 + $0x2c] sm:$0xf]
    %v384 = vld [vmem:[%s6 + $0x30] sm:$0xf]
    %v385 = vld [vmem:[%s6 + $0x34] sm:$0xf]
    %v386 = vld [vmem:[%s6 + $0x38] sm:$0xf]
    %v387 = vld [vmem:[%s6 + $0x3c] sm:$0xf]
    %v388 = vld [vmem:[#allocation11] sm:$0x1]
    %v390 = vlaneseq
    %v391 = vshrl.u32 %v390, 7
    %v392 = vsub.s32 0, %v391
    %v393 = vrot.slane %v388, %v392
    %v411 = vunpack.c.l.b16 %v372
    %v412 = vunpack.c.l.b16 %v373
    %v413 = vunpack.c.l.b16 %v374
    %v414 = vunpack.c.l.b16 %v375
    %v415 = vunpack.c.l.b16 %v376
    %v416 = vunpack.c.l.b16 %v377
    %v417 = vunpack.c.l.b16 %v378
    %v418 = vunpack.c.l.b16 %v379
    %v419 = vunpack.c.l.b16 %v380
    %v420 = vunpack.c.l.b16 %v381
    %v421 = vunpack.c.l.b16 %v382
    %v422 = vunpack.c.l.b16 %v383
    %v423 = vunpack.c.l.b16 %v384
    %v424 = vunpack.c.l.b16 %v385
    %v425 = vunpack.c.l.b16 %v386
    %v426 = vunpack.c.l.b16 %v387
    %v427 = vpack.c.b16 %v412, %v411
    %v428 = vpack.c.b16 %v414, %v413
    %v429 = vpack.c.b16 %v416, %v415
    %v430 = vpack.c.b16 %v418, %v417
    %v431 = vpack.c.b16 %v420, %v419
    %v432 = vpack.c.b16 %v422, %v421
    %v433 = vpack.c.b16 %v424, %v423
    %v434 = vpack.c.b16 %v426, %v425
    %443 = vmatprep.subr.bf16.mxu0 0
    %444 = vmatpush1.bf16.msra.mxu0 %v434
    %445 = vmatprep.subr.bf16.mxu0 0
    %446 = vmatpush1.bf16.msra.mxu0 %v433
    %447 = vmatprep.subr.bf16.mxu0 0
    %448 = vmatpush1.bf16.msra.mxu0 %v432
    %449 = vmatprep.subr.bf16.mxu0 0
    %450 = vmatpush1.bf16.msra.mxu0 %v431
    %451 = vmatprep.subr.bf16.mxu0 0
    %452 = vmatpush1.bf16.msra.mxu0 %v430
    %453 = vmatprep.subr.bf16.mxu0 0
    %454 = vmatpush1.bf16.msra.mxu0 %v429
    %455 = vmatprep.subr.bf16.mxu0 0
    %456 = vmatpush1.bf16.msra.mxu0 %v428
    %457 = vmatprep.subr.bf16.mxu0 0
    %458 = vmatpush1.bf16.msra.mxu0 %v427
    %459 = vmatprep.subr.bf16.mxu0 0
    %460 = vmatpush2.bf16.msra.mxu0 0
    %461 = vmatprep.subr.bf16.mxu0 0
    %462 = vmatpush2.bf16.msra.mxu0 0
    %463 = vmatprep.subr.bf16.mxu0 0
    %464 = vmatpush2.bf16.msra.mxu0 0
    %465 = vmatprep.subr.bf16.mxu0 0
    %466 = vmatpush2.bf16.msra.mxu0 0
    %467 = vmatprep.subr.bf16.mxu0 0
    %468 = vmatpush2.bf16.msra.mxu0 0
    %469 = vmatprep.subr.bf16.mxu0 0
    %470 = vmatpush2.bf16.msra.mxu0 0
    %471 = vmatprep.subr.bf16.mxu0 0
    %472 = vmatpush2.bf16.msra.mxu0 0
    %473 = vmatprep.subr.bf16.mxu0 0
    %474 = vmatpush2.bf16.msra.mxu0 0
    %475 = vmatprep.mubr.bf16.mxu0 0
    %476 = vmatmul.mubr.bf16.gmra.mxu0 %v371
    %v477 = vpop.f32.mrf.mxu0
    %v478 = vadd.f32 %v393, %v477
    %v479 = vpop.f32.mrf.mxu0
    %v480 = vpop.f32.mrf.mxu0
    %v481 = vpop.f32.mrf.mxu0
    %482 = vdwg.mxu0
    %483 = vmax.xlane.f32.xlu0 %v478
    %v484 = vpop.xlane.xlu0 %483
    %v485 = vsub.f32 %v478, %v484
    %v486 = vmul.f32 %v485, 1.442695
    %v487 = vpow.pop %v486
    %488 = vadd.xlane.f32.xlu0 %v487
    %v489 = vpop.xlane.xlu0 %488
    %v490 = vrcp.pop %v489
    %v491 = vmul.f32 %v487, %v490
    %v492 = vpack.c.bf16 %v491, %v491
    %vm493 = vcmask 257024
    %494 = vst.msk [vmem:[#allocation15] sm:$0xf] %vm493, %v492
    %v495 = vld [vmem:[%s8] sm:$0xf]
    %v496 = vld [vmem:[%s8 + $0x4] sm:$0xf]
    %v497 = vld [vmem:[%s8 + $0x8] sm:$0xf]
    %v498 = vld [vmem:[%s8 + $0xc] sm:$0xf]
    %v499 = vld [vmem:[%s8 + $0x10] sm:$0xf]
    %v500 = vld [vmem:[%s8 + $0x14] sm:$0xf]
    %v501 = vld [vmem:[%s8 + $0x18] sm:$0xf]
    %v502 = vld [vmem:[%s8 + $0x1c] sm:$0xf]
    %v503 = vld [vmem:[%s8 + $0x20] sm:$0xf]
    %v504 = vld [vmem:[%s8 + $0x24] sm:$0xf]
    %v505 = vld [vmem:[%s8 + $0x28] sm:$0xf]
    %v506 = vld [vmem:[%s8 + $0x2c] sm:$0xf]
    %v507 = vld [vmem:[%s8 + $0x30] sm:$0xf]
    %v508 = vld [vmem:[%s8 + $0x34] sm:$0xf]
    %v509 = vld [vmem:[%s8 + $0x38] sm:$0xf]
    %v510 = vld [vmem:[%s8 + $0x3c] sm:$0xf]
    %v527 = vunpack.c.l.b16 %v495
    %v528 = vunpack.c.l.b16 %v496
    %v529 = vunpack.c.l.b16 %v497
    %v530 = vunpack.c.l.b16 %v498
    %v531 = vunpack.c.l.b16 %v499
    %v532 = vunpack.c.l.b16 %v500
    %v533 = vunpack.c.l.b16 %v501
    %v534 = vunpack.c.l.b16 %v502
    %v535 = vunpack.c.l.b16 %v503
    %v536 = vunpack.c.l.b16 %v504
    %v537 = vunpack.c.l.b16 %v505
    %v538 = vunpack.c.l.b16 %v506
    %v539 = vunpack.c.l.b16 %v507
    %v540 = vunpack.c.l.b16 %v508
    %v541 = vunpack.c.l.b16 %v509
    %v542 = vunpack.c.l.b16 %v510
    %v543 = vpack.c.b16 %v528, %v527
    %v544 = vpack.c.b16 %v530, %v529
    %v545 = vpack.c.b16 %v532, %v531
    %v546 = vpack.c.b16 %v534, %v533
    %v547 = vpack.c.b16 %v536, %v535
    %v548 = vpack.c.b16 %v538, %v537
    %v549 = vpack.c.b16 %v540, %v539
    %v550 = vpack.c.b16 %v542, %v541
    %559 = vmatprep.subr.bf16.mxu0 0
    %560 = vmatpush1.bf16.msra.mxu0 %v550
    %561 = vmatprep.subr.bf16.mxu0 0
    %562 = vmatpush1.bf16.msra.mxu0 %v549
    %563 = vmatprep.subr.bf16.mxu0 0
    %564 = vmatpush1.bf16.msra.mxu0 %v548
    %565 = vmatprep.subr.bf16.mxu0 0
    %566 = vmatpush1.bf16.msra.mxu0 %v547
    %567 = vmatprep.subr.bf16.mxu0 0
    %568 = vmatpush1.bf16.msra.mxu0 %v546
    %569 = vmatprep.subr.bf16.mxu0 0
    %570 = vmatpush1.bf16.msra.mxu0 %v545
    %571 = vmatprep.subr.bf16.mxu0 0
    %572 = vmatpush1.bf16.msra.mxu0 %v544
    %573 = vmatprep.subr.bf16.mxu0 0
    %574 = vmatpush1.bf16.msra.mxu0 %v543
    %575 = vmatprep.subr.bf16.mxu0 0
    %576 = vmatpush2.bf16.msra.mxu0 0
    %577 = vmatprep.subr.bf16.mxu0 0
    %578 = vmatpush2.bf16.msra.mxu0 0
    %579 = vmatprep.subr.bf16.mxu0 0
    %580 = vmatpush2.bf16.msra.mxu0 0
    %581 = vmatprep.subr.bf16.mxu0 0
    %582 = vmatpush2.bf16.msra.mxu0 0
    %583 = vmatprep.subr.bf16.mxu0 0
    %584 = vmatpush2.bf16.msra.mxu0 0
    %585 = vmatprep.subr.bf16.mxu0 0
    %586 = vmatpush2.bf16.msra.mxu0 0
    %587 = vmatprep.subr.bf16.mxu0 0
    %588 = vmatpush2.bf16.msra.mxu0 0
    %589 = vmatprep.subr.bf16.mxu0 0
    %590 = vmatpush2.bf16.msra.mxu0 0
    %591 = vmatprep.mubr.bf16.mxu0 0
    %592 = vmatmul.mubr.bf16.gmra.mxu0 %v492
    %v593 = vpop.f32.mrf.mxu0
    %v594 = vadd.f32 0.0, %v593
    %v595 = vpop.f32.mrf.mxu0
    %v596 = vpop.f32.mrf.mxu0
    %v597 = vpop.f32.mrf.mxu0
    %598 = vdwg.mxu0
    %v599 = vpack.c.bf16 %v594, %v594
    %v600 = vld [vmem:[%s9] sm:$0xf]
    %v601 = vld [vmem:[%s9 + $0x4] sm:$0xf]
    %v602 = vld [vmem:[%s9 + $0x8] sm:$0xf]
    %v603 = vld [vmem:[%s9 + $0xc] sm:$0xf]
    %v604 = vld [vmem:[%s9 + $0x10] sm:$0xf]
    %v605 = vld [vmem:[%s9 + $0x14] sm:$0xf]
    %v606 = vld [vmem:[%s9 + $0x18] sm:$0xf]
    %v607 = vld [vmem:[%s9 + $0x1c] sm:$0xf]
    %v608 = vld [vmem:[%s10] sm:$0xf]
    %v610 = vsel %vm178, %v144, 0
    %v613 = vsel %vm182, %v608, 0
    %615 = vmatprep.subr.bf16.mxu0 0
    %616 = vmatpush1.bf16.msra.mxu0 0
    %617 = vmatprep.subr.bf16.mxu0 0
    %618 = vmatpush1.bf16.msra.mxu0 0
    %619 = vmatprep.subr.bf16.mxu0 0
    %620 = vmatpush1.bf16.msra.mxu0 0
    %621 = vmatprep.subr.bf16.mxu0 0
    %622 = vmatpush1.bf16.msra.mxu0 0
    %623 = vmatprep.subr.bf16.mxu0 0
    %624 = vmatpush1.bf16.msra.mxu0 0
    %625 = vmatprep.subr.bf16.mxu0 0
    %626 = vmatpush1.bf16.msra.mxu0 0
    %627 = vmatprep.subr.bf16.mxu0 0
    %628 = vmatpush1.bf16.msra.mxu0 0
    %629 = vmatprep.subr.bf16.mxu0 0
    %630 = vmatpush1.bf16.msra.mxu0 %v613
    %631 = vmatprep.subr.bf16.mxu0 0
    %632 = vmatpush2.bf16.msra.mxu0 0
    %633 = vmatprep.subr.bf16.mxu0 0
    %634 = vmatpush2.bf16.msra.mxu0 0
    %635 = vmatprep.subr.bf16.mxu0 0
    %636 = vmatpush2.bf16.msra.mxu0 0
    %637 = vmatprep.subr.bf16.mxu0 0
    %638 = vmatpush2.bf16.msra.mxu0 0
    %639 = vmatprep.subr.bf16.mxu0 0
    %640 = vmatpush2.bf16.msra.mxu0 0
    %641 = vmatprep.subr.bf16.mxu0 0
    %642 = vmatpush2.bf16.msra.mxu0 0
    %643 = vmatprep.subr.bf16.mxu0 0
    %644 = vmatpush2.bf16.msra.mxu0 0
    %645 = vmatprep.subr.bf16.mxu0 0
    %646 = vmatpush2.bf16.msra.mxu0 0
    %647 = vmatprep.mubr.bf16.mxu0 0
    %648 = vmatmul.mubr.bf16.gmra.mxu0 %v610
    %v649 = vpop.f32.mrf.mxu0
    %v650 = vadd.f32 0.0, %v649
    %v651 = vpop.f32.mrf.mxu0
    %v652 = vpop.f32.mrf.mxu0
    %v653 = vpop.f32.mrf.mxu0
    %654 = vdwg.mxu0
    %v663 = vunpack.c.l.b16 %v600
    %v664 = vunpack.c.l.b16 %v601
    %v665 = vunpack.c.l.b16 %v602
    %v666 = vunpack.c.l.b16 %v603
    %v667 = vunpack.c.l.b16 %v604
    %v668 = vunpack.c.l.b16 %v605
    %v669 = vunpack.c.l.b16 %v606
    %v670 = vunpack.c.l.b16 %v607
    %v671 = vpack.c.b16 %v664, %v663
    %v672 = vpack.c.b16 %v666, %v665
    %v673 = vpack.c.b16 %v668, %v667
    %v674 = vpack.c.b16 %v670, %v669
    %vm679 = vcmask 523264
    %v681 = vsel %vm679, %v599, 0
    %683 = vmatprep.subr.bf16.mxu0 0
    %684 = vmatpush1.bf16.msra.mxu0 0
    %685 = vmatprep.subr.bf16.mxu0 0
    %686 = vmatpush1.bf16.msra.mxu0 0
    %687 = vmatprep.subr.bf16.mxu0 0
    %688 = vmatpush1.bf16.msra.mxu0 0
    %689 = vmatprep.subr.bf16.mxu0 0
    %690 = vmatpush1.bf16.msra.mxu0 0
    %691 = vmatprep.subr.bf16.mxu0 0
    %692 = vmatpush1.bf16.msra.mxu0 %v674
    %693 = vmatprep.subr.bf16.mxu0 0
    %694 = vmatpush1.bf16.msra.mxu0 %v673
    %695 = vmatprep.subr.bf16.mxu0 0
    %696 = vmatpush1.bf16.msra.mxu0 %v672
    %697 = vmatprep.subr.bf16.mxu0 0
    %698 = vmatpush1.bf16.msra.mxu0 %v671
    %699 = vmatprep.subr.bf16.mxu0 0
    %700 = vmatpush2.bf16.msra.mxu0 0
    %701 = vmatprep.subr.bf16.mxu0 0
    %702 = vmatpush2.bf16.msra.mxu0 0
    %703 = vmatprep.subr.bf16.mxu0 0
    %704 = vmatpush2.bf16.msra.mxu0 0
    %705 = vmatprep.subr.bf16.mxu0 0
    %706 = vmatpush2.bf16.msra.mxu0 0
    %707 = vmatprep.subr.bf16.mxu0 0
    %708 = vmatpush2.bf16.msra.mxu0 0
    %709 = vmatprep.subr.bf16.mxu0 0
    %710 = vmatpush2.bf16.msra.mxu0 0
    %711 = vmatprep.subr.bf16.mxu0 0
    %712 = vmatpush2.bf16.msra.mxu0 0
    %713 = vmatprep.subr.bf16.mxu0 0
    %714 = vmatpush2.bf16.msra.mxu0 0
    %715 = vmatprep.mubr.bf16.mxu0 0
    %716 = vmatmul.mubr.bf16.gmra.mxu0 %v681
    %v717 = vpop.f32.mrf.mxu0
    %v718 = vadd.f32 %v650, %v717
    %v719 = vpop.f32.mrf.mxu0
    %v720 = vpop.f32.mrf.mxu0
    %v721 = vpop.f32.mrf.mxu0
    %722 = vdwg.mxu0
    %v723 = vld [vmem:[%s11] sm:$0x1]
    %v725 = vlaneseq
    %v726 = vshrl.u32 %v725, 7
    %v727 = vsub.s32 0, %v726
    %v728 = vrot.slane %v723, %v727
    %v730 = vadd.f32 %v718, %v728
    %v731 = vmax.f32 %v730, 0.0
    %v732 = vpack.c.bf16 %v731, %v731
    %v733 = vld [vmem:[#allocation13] sm:$0xff]
    %v734 = vld [vmem:[#allocation13 + $0x8] sm:$0xff]
    %v735 = vld [vmem:[#allocation13 + $0x10] sm:$0xff]
    %v736 = vld [vmem:[#allocation13 + $0x18] sm:$0xff]
    %v737 = vld [vmem:[#allocation13 + $0x20] sm:$0xff]
    %v738 = vld [vmem:[#allocation13 + $0x28] sm:$0xff]
    %v739 = vld [vmem:[#allocation13 + $0x30] sm:$0xff]
    %v740 = vld [vmem:[#allocation13 + $0x38] sm:$0xff]
    %v741 = vld [vmem:[#allocation13 + $0x40] sm:$0xff]
    %v742 = vld [vmem:[#allocation13 + $0x48] sm:$0xff]
    %v743 = vld [vmem:[#allocation13 + $0x50] sm:$0xff]
    %v744 = vld [vmem:[#allocation13 + $0x58] sm:$0xff]
    %v745 = vld [vmem:[#allocation13 + $0x60] sm:$0xff]
    %v746 = vld [vmem:[#allocation13 + $0x68] sm:$0xff]
    %v747 = vld [vmem:[#allocation13 + $0x70] sm:$0xff]
    %v748 = vld [vmem:[#allocation13 + $0x78] sm:$0xff]
    %v749 = vld [vmem:[%s13] sm:$0x3]
    %v751 = vlaneseq
    %v752 = vshrl.u32 %v751, 7
    %v753 = vsub.s32 0, %v752
    %v754 = vrot.slane %v749, %v753
    %v755 = vlaneseq
    %v756 = vshrl.u32 %v755, 7
    %v757 = vsub.s32 1, %v756
    %v758 = vrot.slane %v749, %v757
    %v777 = vunpack.c.l.b16 %v733
    %v778 = vunpack.c.h.b16 %v733
    %v779 = vunpack.c.l.b16 %v734
    %v780 = vunpack.c.h.b16 %v734
    %v781 = vunpack.c.l.b16 %v735
    %v782 = vunpack.c.h.b16 %v735
    %v783 = vunpack.c.l.b16 %v736
    %v784 = vunpack.c.h.b16 %v736
    %v785 = vunpack.c.l.b16 %v737
    %v786 = vunpack.c.h.b16 %v737
    %v787 = vunpack.c.l.b16 %v738
    %v788 = vunpack.c.h.b16 %v738
    %v789 = vunpack.c.l.b16 %v739
    %v790 = vunpack.c.h.b16 %v739
    %v791 = vunpack.c.l.b16 %v740
    %v792 = vunpack.c.h.b16 %v740
    %v793 = vunpack.c.l.b16 %v741
    %v794 = vunpack.c.h.b16 %v741
    %v795 = vunpack.c.l.b16 %v742
    %v796 = vunpack.c.h.b16 %v742
    %v797 = vunpack.c.l.b16 %v743
    %v798 = vunpack.c.h.b16 %v743
    %v799 = vunpack.c.l.b16 %v744
    %v800 = vunpack.c.h.b16 %v744
    %v801 = vunpack.c.l.b16 %v745
    %v802 = vunpack.c.h.b16 %v745
    %v803 = vunpack.c.l.b16 %v746
    %v804 = vunpack.c.h.b16 %v746
    %v805 = vunpack.c.l.b16 %v747
    %v806 = vunpack.c.h.b16 %v747
    %v807 = vunpack.c.l.b16 %v748
    %v808 = vunpack.c.h.b16 %v748
    %v809 = vpack.c.b16 %v779, %v777
    %v810 = vpack.c.b16 %v780, %v778
    %v811 = vpack.c.b16 %v783, %v781
    %v812 = vpack.c.b16 %v784, %v782
    %v813 = vpack.c.b16 %v787, %v785
    %v814 = vpack.c.b16 %v788, %v786
    %v815 = vpack.c.b16 %v791, %v789
    %v816 = vpack.c.b16 %v792, %v790
    %v817 = vpack.c.b16 %v795, %v793
    %v818 = vpack.c.b16 %v796, %v794
    %v819 = vpack.c.b16 %v799, %v797
    %v820 = vpack.c.b16 %v800, %v798
    %v821 = vpack.c.b16 %v803, %v801
    %v822 = vpack.c.b16 %v804, %v802
    %v823 = vpack.c.b16 %v807, %v805
    %v824 = vpack.c.b16 %v808, %v806
    %841 = vmatprep.subr.bf16.mxu0 %v824
    %842 = vmatpush1.bf16.msra.mxu0 %v823
    %843 = vmatprep.subr.bf16.mxu0 %v822
    %844 = vmatpush1.bf16.msra.mxu0 %v821
    %845 = vmatprep.subr.bf16.mxu0 %v820
    %846 = vmatpush1.bf16.msra.mxu0 %v819
    %847 = vmatprep.subr.bf16.mxu0 %v818
    %848 = vmatpush1.bf16.msra.mxu0 %v817
    %849 = vmatprep.subr.bf16.mxu0 %v816
    %850 = vmatpush1.bf16.msra.mxu0 %v815
    %851 = vmatprep.subr.bf16.mxu0 %v814
    %852 = vmatpush1.bf16.msra.mxu0 %v813
    %853 = vmatprep.subr.bf16.mxu0 %v812
    %854 = vmatpush1.bf16.msra.mxu0 %v811
    %855 = vmatprep.subr.bf16.mxu0 %v810
    %856 = vmatpush1.bf16.msra.mxu0 %v809
    %857 = vmatprep.subr.bf16.mxu0 0
    %858 = vmatpush2.bf16.msra.mxu0 0
    %859 = vmatprep.subr.bf16.mxu0 0
    %860 = vmatpush2.bf16.msra.mxu0 0
    %861 = vmatprep.subr.bf16.mxu0 0
    %862 = vmatpush2.bf16.msra.mxu0 0
    %863 = vmatprep.subr.bf16.mxu0 0
    %864 = vmatpush2.bf16.msra.mxu0 0
    %865 = vmatprep.subr.bf16.mxu0 0
    %866 = vmatpush2.bf16.msra.mxu0 0
    %867 = vmatprep.subr.bf16.mxu0 0
    %868 = vmatpush2.bf16.msra.mxu0 0
    %869 = vmatprep.subr.bf16.mxu0 0
    %870 = vmatpush2.bf16.msra.mxu0 0
    %871 = vmatprep.subr.bf16.mxu0 0
    %872 = vmatpush2.bf16.msra.mxu0 0
    %873 = vmatprep.mubr.bf16.mxu0 0
    %874 = vmatmul.mubr.bf16.gmra.mxu0 %v732
    %v875 = vpop.f32.mrf.mxu0
    %v876 = vadd.f32 %v754, %v875
    %v877 = vpop.f32.mrf.mxu0
    %v878 = vadd.f32 %v758, %v877
    %v879 = vpop.f32.mrf.mxu0
    %v880 = vpop.f32.mrf.mxu0
    %881 = vdwg.mxu0
    %v882 = vxor.u32 %v876, 2147483648
    %v883 = vxor.u32 %v878, 2147483648
    %v884 = vmul.f32 %v882, 1.442695
    %v885 = vpow.pop %v884
    %v886 = vmul.f32 %v883, 1.442695
    %v887 = vpow.pop %v886
    %v888 = vadd.f32 %v885, 1.0
    %v889 = vadd.f32 %v887, 1.0
    %v890 = vrcp.pop %v888
    %v891 = vmul.f32 1.0, %v890
    %v892 = vrcp.pop %v889
    %v893 = vmul.f32 1.0, %v892
    %v894 = vpack.c.bf16 %v891, %v891
    %v895 = vpack.c.bf16 %v893, %v893
    %v898 = vunpack.c.l.b16 %v894
    %v899 = vunpack.c.l.b16 %v895
    %v900 = vpack.c.b16 %v899, %v898
    %902 = vst [vmem:[#allocation14] sm:$0xff] %v900
    // Predicated region
    $region86: #{tpu_custom_call.1} parent=1 // pred_check
      _
    $region87: #{tpu_custom_call.1} parent=1 // pred_check_branch
      %904 = sbr.rel (0) target = $region89
    $region88: #{tpu_custom_call.1} parent=1 // pred_region
      %s906 = ssub.s32 128, 128
      %907 = vsyncadd [#allocation4], %s906
      %s909 = sshll.u32 [#allocation14], 4
      %s910 = int_to_ptr.vmem [resolvable:$true] %s909
      %912 = dma.vmem_to_hbm [thread:$0]  %s910, 128, %s14, [#allocation4]
    $region89: #{tpu_custom_call.1} parent=1 // pred_fallthru
      _
    // Predicated region
    $region90: #{tpu_custom_call.1} parent=1 // pred_check
      _
    $region91: #{tpu_custom_call.1} parent=1 // pred_check_branch
      %914 = sbr.rel (0) target = $region93
    $region92: #{tpu_custom_call.1} parent=1 // pred_region
      %s916 = ssub.s32 64, 64
      %917 = vsyncadd [#allocation16], %s916
      %s919 = sshll.u32 [#allocation15], 4
      %s920 = int_to_ptr.vmem [resolvable:$true] %s919
      %922 = dma.vmem_to_hbm [thread:$0]  %s920, 64, %s15, [#allocation16]
    $region93: #{tpu_custom_call.1} parent=1 // pred_fallthru
      _
    // Predicated region
    $region94: #{tpu_custom_call.1} parent=1 // pred_check
      _
    $region95: #{tpu_custom_call.1} parent=1 // pred_check_branch
      %924 = sbr.rel (0) target = $region97
    $region96: #{tpu_custom_call.1} parent=1 // pred_region
      %925 = dma.done [#allocation4], 128
    $region97: #{tpu_custom_call.1} parent=1 // pred_fallthru
      _
    // Predicated region
    $region98: #{tpu_custom_call.1} parent=1 // pred_check
      _
    $region99: #{tpu_custom_call.1} parent=1 // pred_check_branch
      %927 = sbr.rel (0) target = $region101
    $region100: #{tpu_custom_call.1} parent=1 // pred_region
      %928 = dma.done [#allocation16], 64
    $region101: #{tpu_custom_call.1} parent=1 // pred_fallthru
      _
    %929 = vsyncpa [#allocation3], 1
    %930 = vsyncpa [#allocation6], 1
    %931 = vsyncpa [#allocation9], 1
    %932 = vsyncpa [#allocation12], 1
    %933 = vsyncpa [#allocation4], 1
    %934 = vsyncpa [#allocation16], 1

</llo_original>
